<compile_context>
chip_gen: v7x
topology: tpu7x:2x2x1
jax: 0.10.0
libtpu: 0.0.40
codegen_flags: <defaults>
</compile_context>

<pallas_src>
import functools

import jax
import jax.numpy as jnp
from jax.experimental import pallas as pl
from jax.experimental.pallas import tpu as pltpu


def _round_up(x, m):
    return ((x + m - 1) // m) * m


# --------------------------------------------------------------------------
# Pallas kernel
# --------------------------------------------------------------------------
def value_network2_kernel(
    state_ref,                      # (N, TB, D)  time-major batch tile
    w1_ref, b1_ref,                 # mlp1 layer 1: (D, H1), (1, H1)
    w_xh_ref, b_xh_ref,             # folded mlp1-l2 + LSTM in-proj: (H1, 4*LH), (1, 4*LH)
    w_hh_ref,                       # LSTM recurrent weights: (LH, 4*LH)
    wm1_s_ref, wm1_h_ref, bm1_ref,  # value-mlp layer 1 split: (S, M1), (LH, M1), (1, M1)
    wm2_ref, bm2_ref,               # value-mlp layer 2: (M1, M2p), (1, M2p)
    out_ref,                        # (1, M2p, TB)  batch on lanes
    *,
    self_state_dim,
    lstm_hidden_dim,
    ff_dtype,
):
    N, TB, D = state_ref.shape
    LH = lstm_hidden_dim

    state = state_ref[...]                                      # (N, TB, D)

    # ---- mlp1 layer 1 (+ReLU) over flattened (N*TB, D) rows ----
    x = state.reshape(N * TB, D)
    h1 = jnp.maximum(
        jnp.dot(x.astype(ff_dtype), w1_ref[...].astype(ff_dtype),
                preferred_element_type=jnp.float32) + b1_ref[...],
        0.0,
    )

    # ---- folded mlp1 layer-2 + LSTM input projection, hoisted out of loop ----
    x_proj = (
        jnp.dot(h1.astype(ff_dtype), w_xh_ref[...].astype(ff_dtype),
                preferred_element_type=jnp.float32) + b_xh_ref[...]
    ).reshape(N, TB, 4 * LH)                                    # time-major

    # ---- LSTM recurrence over time (single layer, zero init) ----
    w_hh = w_hh_ref[...]
    h = jnp.zeros((TB, LH), jnp.float32)
    c = jnp.zeros((TB, LH), jnp.float32)
    for t in range(N):                                          # N static & small
        # contiguous (TB, 4*LH) slab — no strided gather on the serial path
        gates = x_proj[t] + jnp.dot(h, w_hh, preferred_element_type=jnp.float32)
        sg = jax.nn.sigmoid(gates)     # one EUP pass over the full 4*LH lanes
        tg = jnp.tanh(gates)           # one EUP pass over the full 4*LH lanes
        i_g = sg[:, 0 * LH:1 * LH]
        f_g = sg[:, 1 * LH:2 * LH]
        g_g = tg[:, 2 * LH:3 * LH]
        o_g = sg[:, 3 * LH:4 * LH]
        c = f_g * c + i_g * g_g
        h = o_g * jnp.tanh(c)

    # ---- value mlp on cat([self_state, h_n]) done as a split matmul ----
    self_state = state[0, :, :self_state_dim]                   # (TB, S) contiguous
    hidden = jnp.maximum(
        jnp.dot(self_state, wm1_s_ref[...], preferred_element_type=jnp.float32)
        + jnp.dot(h, wm1_h_ref[...], preferred_element_type=jnp.float32)
        + bm1_ref[...],
        0.0,
    )
    val = (
        jnp.dot(hidden, wm2_ref[...], preferred_element_type=jnp.float32)
        + bm2_ref[...]
    )                                                           # (TB, M2p)
    # Batch-lane-dense store: (M2p, TB) row with batch on the 128-lane axis.
    out_ref[0] = val.T


# --------------------------------------------------------------------------
# One-time parameter preparation (fold + output padding) — jit/cache friendly
# --------------------------------------------------------------------------
def prepare_value_network2_params(params):
    M1, M2 = params["wm2"].shape
    M2p = _round_up(max(M2, 1), 8)
    # Fold mlp1 layer 2 into the LSTM input projection (exact: no nonlinearity
    # between them).
    w_xh = params["w2"] @ params["w_ih"]                        # (H1, 4*LH)
    b_xh = params["b2"] @ params["w_ih"] + params["b_lstm"]     # (1, 4*LH)
    wm2_p = jnp.zeros((M1, M2p), jnp.float32).at[:, :M2].set(params["wm2"])
    bm2_p = jnp.zeros((1, M2p), jnp.float32).at[:, :M2].set(params["bm2"])
    return {
        "w1": params["w1"], "b1": params["b1"],
        "w_xh": w_xh, "b_xh": b_xh, "w_hh": params["w_hh"],
        "wm1_s": params["wm1_s"], "wm1_h": params["wm1_h"], "bm1": params["bm1"],
        "wm2_p": wm2_p, "bm2_p": bm2_p,
        "out_dim": M2,
    }


# --------------------------------------------------------------------------
# Wrapper
# --------------------------------------------------------------------------
def value_network2(state, prepared, *, self_state_dim, lstm_hidden_dim,
                   batch_tile=512, ff_dtype=jnp.float32):
    B, N, D = state.shape
    M2 = prepared["out_dim"]
    M2p = prepared["wm2_p"].shape[1]

    # Batch-tile selection: >=2 grid steps once B >= 16 (uses both TCs on v7x),
    # capped at batch_tile (default 512: fits v7x's 64 MiB VMEM with headroom).
    if B < 16:
        TB = B                      # single tile, fully resident
    else:
        TB = min(batch_tile, _round_up(pl.cdiv(B, 2), 8))
    G = pl.cdiv(B, TB)
    Bp = G * TB

    # Time-major layout (N, B, D); pad only the batch remainder (no full copy
    # when B is already a multiple of TB).
    state_t = jnp.transpose(state, (1, 0, 2))
    if Bp != B:
        state_t = jnp.pad(state_t, ((0, 0), (0, Bp - B), (0, 0)))

    weights = (
        prepared["w1"], prepared["b1"],
        prepared["w_xh"], prepared["b_xh"], prepared["w_hh"],
        prepared["wm1_s"], prepared["wm1_h"], prepared["bm1"],
        prepared["wm2_p"], prepared["bm2_p"],
    )
    kernel = functools.partial(
        value_network2_kernel,
        self_state_dim=self_state_dim,
        lstm_hidden_dim=lstm_hidden_dim,
        ff_dtype=ff_dtype,
    )
    weight_specs = [pl.BlockSpec(w.shape, lambda i: (0, 0)) for w in weights]
    out = pl.pallas_call(
        kernel,
        out_shape=jax.ShapeDtypeStruct((G, M2p, TB), jnp.float32),
        grid=(G,),
        in_specs=[pl.BlockSpec((N, TB, D), lambda i: (0, i, 0))] + weight_specs,
        out_specs=pl.BlockSpec((1, M2p, TB), lambda i: (i, 0, 0)),
        compiler_params=pltpu.CompilerParams(
            dimension_semantics=("parallel",),
            vmem_limit_bytes=32 * 1024 * 1024,
        ),
    )(state_t, *weights)
    # (G, M2p, TB) -> (Bp, M2p) -> (B, M2)
    out = out.transpose(0, 2, 1).reshape(Bp, M2p)
    return out[:B, :M2]


# --------------------------------------------------------------------------
# Pure-JAX reference (mirrors the PyTorch forward exactly, unfolded)
# --------------------------------------------------------------------------
def value_network2_ref(state, params, *, self_state_dim, lstm_hidden_dim):
    B, N, D = state.shape
    LH = lstm_hidden_dim
    x = state.reshape(B * N, D)
    h1 = jnp.maximum(x @ params["w1"] + params["b1"], 0.0)
    h2 = h1 @ params["w2"] + params["b2"]
    m = h2.reshape(B, N, -1)
    h = jnp.zeros((B, LH), jnp.float32)
    c = jnp.zeros((B, LH), jnp.float32)
    for t in range(N):
        gates = m[:, t] @ params["w_ih"] + h @ params["w_hh"] + params["b_lstm"]
        i_g = jax.nn.sigmoid(gates[:, :LH])
        f_g = jax.nn.sigmoid(gates[:, LH:2 * LH])
        g_g = jnp.tanh(gates[:, 2 * LH:3 * LH])
        o_g = jax.nn.sigmoid(gates[:, 3 * LH:])
        c = f_g * c + i_g * g_g
        h = o_g * jnp.tanh(c)
    ss = state[:, 0, :self_state_dim]
    hid = jnp.maximum(ss @ params["wm1_s"] + h @ params["wm1_h"] + params["bm1"], 0.0)
    return hid @ params["wm2"] + params["bm2"]


# --------------------------------------------------------------------------
# Deterministic parameter construction (shapes per ValueNetwork2.__init__)
# --------------------------------------------------------------------------
def make_params(key, input_dim, self_state_dim, mlp1_dims, mlp_dims, lstm_hidden_dim):
    H1, H2 = mlp1_dims
    M1, M2 = mlp_dims
    LH = lstm_hidden_dim
    S = self_state_dim
    ks = jax.random.split(key, 13)

    def init(k, shape, scale=0.1):
        return (scale * jax.random.normal(k, shape)).astype(jnp.float32)

    joint_dim = S + LH
    wm1 = init(ks[8], (joint_dim, M1))
    params = {
        # mlp1: Linear(input_dim,H1)+ReLU, Linear(H1,H2)  (last layer no ReLU)
        "w1": init(ks[0], (input_dim, H1)), "b1": init(ks[1], (1, H1)),
        "w2": init(ks[2], (H1, H2)),        "b2": init(ks[3], (1, H2)),
        # LSTM(H2, LH): weights pre-transposed, biases b_ih + b_hh folded
        "w_ih": init(ks[4], (H2, 4 * LH)),
        "w_hh": init(ks[5], (LH, 4 * LH)),
        "b_lstm": init(ks[6], (1, 4 * LH)) + init(ks[7], (1, 4 * LH)),
        # value mlp: Linear(S+LH, M1)+ReLU, Linear(M1, M2)
        "wm1_s": wm1[:S, :], "wm1_h": wm1[S:, :], "bm1": init(ks[9], (1, M1)),
        "wm2": init(ks[10], (M1, M2)),           "bm2": init(ks[11], (1, M2)),
    }
    return params


# --------------------------------------------------------------------------
if __name__ == "__main__":
    # Small shapes consistent with the module (CrowdNav-style dims).
    B, N = 2, 8                    # batch, number of agents / sequence length
    input_dim = 13
    self_state_dim = 6
    mlp1_dims = (32, 32)
    lstm_hidden_dim = 32
    mlp_dims = (32, 1)

    key = jax.random.PRNGKey(0)
    k_state, k_params = jax.random.split(key)
    state = jax.random.normal(k_state, (B, N, input_dim), dtype=jnp.float32)
    params = make_params(k_params, input_dim, self_state_dim,
                         mlp1_dims, mlp_dims, lstm_hidden_dim)
    prepared = prepare_value_network2_params(params)   # once per parameter set

    out = value_network2(state, prepared,
                         self_state_dim=self_state_dim,
                         lstm_hidden_dim=lstm_hidden_dim)
    out = jax.block_until_ready(out)

    ref = value_network2_ref(state, params,
                             self_state_dim=self_state_dim,
                             lstm_hidden_dim=lstm_hidden_dim)
    assert out.shape == (B, mlp_dims[-1])
    assert jnp.allclose(out, ref, atol=1e-4, rtol=1e-4), (out, ref)
    print("KERNEL_OK")
</pallas_src>

<mosaic_0001>
module attributes {stable_mosaic.version = 11 : i64} {
  func.func @value_network2_kernel(%arg0: i32, %arg1: memref<8x2x13xf32, #tpu.memory_space<vmem>>, %arg2: memref<13x32xf32, #tpu.memory_space<vmem>>, %arg3: memref<1x32xf32, #tpu.memory_space<vmem>>, %arg4: memref<32x128xf32, #tpu.memory_space<vmem>>, %arg5: memref<1x128xf32, #tpu.memory_space<vmem>>, %arg6: memref<32x128xf32, #tpu.memory_space<vmem>>, %arg7: memref<6x32xf32, #tpu.memory_space<vmem>>, %arg8: memref<32x32xf32, #tpu.memory_space<vmem>>, %arg9: memref<1x32xf32, #tpu.memory_space<vmem>>, %arg10: memref<32x8xf32, #tpu.memory_space<vmem>>, %arg11: memref<1x8xf32, #tpu.memory_space<vmem>>, %arg12: memref<1x8x2xf32, #tpu.memory_space<vmem>>) attributes {dimension_semantics = [#tpu.dimension_semantics<parallel>], iteration_bounds = array<i64: 1>, scalar_prefetch = 0 : i64, scratch_operands = 0 : i64, tpu.core_type = #tpu.core_type<tc>, window_params = [{transform_indices = @transform_0, window_bounds = array<i64: 8, 2, 13>}, {pipeline_mode = #tpu.pipeline_mode<synchronous>, transform_indices = @transform_1, window_bounds = array<i64: 13, 32>}, {pipeline_mode = #tpu.pipeline_mode<synchronous>, transform_indices = @transform_2, window_bounds = array<i64: 1, 32>}, {pipeline_mode = #tpu.pipeline_mode<synchronous>, transform_indices = @transform_3, window_bounds = array<i64: 32, 128>}, {pipeline_mode = #tpu.pipeline_mode<synchronous>, transform_indices = @transform_4, window_bounds = array<i64: 1, 128>}, {pipeline_mode = #tpu.pipeline_mode<synchronous>, transform_indices = @transform_5, window_bounds = array<i64: 32, 128>}, {pipeline_mode = #tpu.pipeline_mode<synchronous>, transform_indices = @transform_6, window_bounds = array<i64: 6, 32>}, {pipeline_mode = #tpu.pipeline_mode<synchronous>, transform_indices = @transform_7, window_bounds = array<i64: 32, 32>}, {pipeline_mode = #tpu.pipeline_mode<synchronous>, transform_indices = @transform_8, window_bounds = array<i64: 1, 32>}, {pipeline_mode = #tpu.pipeline_mode<synchronous>, transform_indices = @transform_9, window_bounds = array<i64: 32, 8>}, {pipeline_mode = #tpu.pipeline_mode<synchronous>, transform_indices = @transform_10, window_bounds = array<i64: 1, 8>}, {transform_indices = @transform_11, window_bounds = array<i64: 1, 8, 2>}]} {
    %c0 = arith.constant 0 : index
    %c0_0 = arith.constant 0 : index
    %c0_1 = arith.constant 0 : index
    %0 = vector.load %arg1[%c0, %c0_0, %c0_1] : memref<8x2x13xf32, #tpu.memory_space<vmem>>, vector<8x2x13xf32>
    %1 = vector.shape_cast %0 : vector<8x2x13xf32> to vector<16x13xf32>
    %c0_2 = arith.constant 0 : index
    %c0_3 = arith.constant 0 : index
    %2 = vector.load %arg2[%c0_2, %c0_3] : memref<13x32xf32, #tpu.memory_space<vmem>>, vector<13x32xf32>
    %cst = arith.constant dense<0.000000e+00> : vector<16x32xf32>
    %3 = tpu.matmul %1, %2, %cst {dimension_numbers = #tpu.dot_dimension_numbers<[1], [0], [0], [1], [0, 0, 1, 1], [], []>} : vector<16x13xf32>, vector<13x32xf32>, vector<16x32xf32> -> vector<16x32xf32>
    %c0_4 = arith.constant 0 : index
    %c0_5 = arith.constant 0 : index
    %4 = vector.load %arg3[%c0_4, %c0_5] : memref<1x32xf32, #tpu.memory_space<vmem>>, vector<1x32xf32>
    %5 = vector.broadcast %4 : vector<1x32xf32> to vector<16x32xf32>
    %6 = arith.addf %3, %5 : vector<16x32xf32>
    %cst_6 = arith.constant 0.000000e+00 : f32
    %7 = vector.broadcast %cst_6 : f32 to vector<16x32xf32>
    %8 = arith.maximumf %6, %7 : vector<16x32xf32>
    %c0_7 = arith.constant 0 : index
    %c0_8 = arith.constant 0 : index
    %9 = vector.load %arg4[%c0_7, %c0_8] : memref<32x128xf32, #tpu.memory_space<vmem>>, vector<32x128xf32>
    %cst_9 = arith.constant dense<0.000000e+00> : vector<16x128xf32>
    %10 = tpu.matmul %8, %9, %cst_9 {dimension_numbers = #tpu.dot_dimension_numbers<[1], [0], [0], [1], [0, 0, 1, 1], [], []>} : vector<16x32xf32>, vector<32x128xf32>, vector<16x128xf32> -> vector<16x128xf32>
    %c0_10 = arith.constant 0 : index
    %c0_11 = arith.constant 0 : index
    %11 = vector.load %arg5[%c0_10, %c0_11] : memref<1x128xf32, #tpu.memory_space<vmem>>, vector<1x128xf32>
    %12 = vector.broadcast %11 : vector<1x128xf32> to vector<16x128xf32>
    %13 = arith.addf %10, %12 : vector<16x128xf32>
    %14 = vector.shape_cast %13 : vector<16x128xf32> to vector<8x2x128xf32>
    %c0_12 = arith.constant 0 : index
    %c0_13 = arith.constant 0 : index
    %15 = vector.load %arg6[%c0_12, %c0_13] : memref<32x128xf32, #tpu.memory_space<vmem>>, vector<32x128xf32>
    %cst_14 = arith.constant 0.000000e+00 : f32
    %16 = vector.broadcast %cst_14 : f32 to vector<2x32xf32>
    %cst_15 = arith.constant 0.000000e+00 : f32
    %17 = vector.broadcast %cst_15 : f32 to vector<2x32xf32>
    %18 = vector.extract_strided_slice %14 {offsets = [0, 0, 0], sizes = [1, 2, 128], strides = [1, 1, 1]} : vector<8x2x128xf32> to vector<1x2x128xf32>
    %19 = vector.shape_cast %18 : vector<1x2x128xf32> to vector<2x128xf32>
    %cst_16 = arith.constant dense<0.000000e+00> : vector<2x128xf32>
    %20 = tpu.matmul %16, %15, %cst_16 {dimension_numbers = #tpu.dot_dimension_numbers<[1], [0], [0], [1], [0, 0, 1, 1], [], []>} : vector<2x32xf32>, vector<32x128xf32>, vector<2x128xf32> -> vector<2x128xf32>
    %21 = arith.addf %19, %20 : vector<2x128xf32>
    %22 = arith.negf %21 : vector<2x128xf32>
    %23 = math.exp %22 : vector<2x128xf32>
    %cst_17 = arith.constant 1.000000e+00 : f32
    %24 = vector.broadcast %cst_17 : f32 to vector<2x128xf32>
    %25 = arith.addf %24, %23 : vector<2x128xf32>
    %26 = arith.divf %24, %25 : vector<2x128xf32>
    %27 = math.tanh %21 : vector<2x128xf32>
    %28 = vector.extract_strided_slice %26 {offsets = [0, 0], sizes = [2, 32], strides = [1, 1]} : vector<2x128xf32> to vector<2x32xf32>
    %29 = vector.extract_strided_slice %26 {offsets = [0, 32], sizes = [2, 32], strides = [1, 1]} : vector<2x128xf32> to vector<2x32xf32>
    %30 = vector.extract_strided_slice %27 {offsets = [0, 64], sizes = [2, 32], strides = [1, 1]} : vector<2x128xf32> to vector<2x32xf32>
    %31 = vector.extract_strided_slice %26 {offsets = [0, 96], sizes = [2, 32], strides = [1, 1]} : vector<2x128xf32> to vector<2x32xf32>
    %32 = arith.mulf %29, %17 : vector<2x32xf32>
    %33 = arith.mulf %28, %30 : vector<2x32xf32>
    %34 = arith.addf %32, %33 : vector<2x32xf32>
    %35 = math.tanh %34 : vector<2x32xf32>
    %36 = arith.mulf %31, %35 : vector<2x32xf32>
    %37 = vector.extract_strided_slice %14 {offsets = [1, 0, 0], sizes = [1, 2, 128], strides = [1, 1, 1]} : vector<8x2x128xf32> to vector<1x2x128xf32>
    %38 = vector.shape_cast %37 : vector<1x2x128xf32> to vector<2x128xf32>
    %cst_18 = arith.constant dense<0.000000e+00> : vector<2x128xf32>
    %39 = tpu.matmul %36, %15, %cst_18 {dimension_numbers = #tpu.dot_dimension_numbers<[1], [0], [0], [1], [0, 0, 1, 1], [], []>} : vector<2x32xf32>, vector<32x128xf32>, vector<2x128xf32> -> vector<2x128xf32>
    %40 = arith.addf %38, %39 : vector<2x128xf32>
    %41 = arith.negf %40 : vector<2x128xf32>
    %42 = math.exp %41 : vector<2x128xf32>
    %cst_19 = arith.constant 1.000000e+00 : f32
    %43 = vector.broadcast %cst_19 : f32 to vector<2x128xf32>
    %44 = arith.addf %43, %42 : vector<2x128xf32>
    %45 = arith.divf %43, %44 : vector<2x128xf32>
    %46 = math.tanh %40 : vector<2x128xf32>
    %47 = vector.extract_strided_slice %45 {offsets = [0, 0], sizes = [2, 32], strides = [1, 1]} : vector<2x128xf32> to vector<2x32xf32>
    %48 = vector.extract_strided_slice %45 {offsets = [0, 32], sizes = [2, 32], strides = [1, 1]} : vector<2x128xf32> to vector<2x32xf32>
    %49 = vector.extract_strided_slice %46 {offsets = [0, 64], sizes = [2, 32], strides = [1, 1]} : vector<2x128xf32> to vector<2x32xf32>
    %50 = vector.extract_strided_slice %45 {offsets = [0, 96], sizes = [2, 32], strides = [1, 1]} : vector<2x128xf32> to vector<2x32xf32>
    %51 = arith.mulf %48, %34 : vector<2x32xf32>
    %52 = arith.mulf %47, %49 : vector<2x32xf32>
    %53 = arith.addf %51, %52 : vector<2x32xf32>
    %54 = math.tanh %53 : vector<2x32xf32>
    %55 = arith.mulf %50, %54 : vector<2x32xf32>
    %56 = vector.extract_strided_slice %14 {offsets = [2, 0, 0], sizes = [1, 2, 128], strides = [1, 1, 1]} : vector<8x2x128xf32> to vector<1x2x128xf32>
    %57 = vector.shape_cast %56 : vector<1x2x128xf32> to vector<2x128xf32>
    %cst_20 = arith.constant dense<0.000000e+00> : vector<2x128xf32>
    %58 = tpu.matmul %55, %15, %cst_20 {dimension_numbers = #tpu.dot_dimension_numbers<[1], [0], [0], [1], [0, 0, 1, 1], [], []>} : vector<2x32xf32>, vector<32x128xf32>, vector<2x128xf32> -> vector<2x128xf32>
    %59 = arith.addf %57, %58 : vector<2x128xf32>
    %60 = arith.negf %59 : vector<2x128xf32>
    %61 = math.exp %60 : vector<2x128xf32>
    %cst_21 = arith.constant 1.000000e+00 : f32
    %62 = vector.broadcast %cst_21 : f32 to vector<2x128xf32>
    %63 = arith.addf %62, %61 : vector<2x128xf32>
    %64 = arith.divf %62, %63 : vector<2x128xf32>
    %65 = math.tanh %59 : vector<2x128xf32>
    %66 = vector.extract_strided_slice %64 {offsets = [0, 0], sizes = [2, 32], strides = [1, 1]} : vector<2x128xf32> to vector<2x32xf32>
    %67 = vector.extract_strided_slice %64 {offsets = [0, 32], sizes = [2, 32], strides = [1, 1]} : vector<2x128xf32> to vector<2x32xf32>
    %68 = vector.extract_strided_slice %65 {offsets = [0, 64], sizes = [2, 32], strides = [1, 1]} : vector<2x128xf32> to vector<2x32xf32>
    %69 = vector.extract_strided_slice %64 {offsets = [0, 96], sizes = [2, 32], strides = [1, 1]} : vector<2x128xf32> to vector<2x32xf32>
    %70 = arith.mulf %67, %53 : vector<2x32xf32>
    %71 = arith.mulf %66, %68 : vector<2x32xf32>
    %72 = arith.addf %70, %71 : vector<2x32xf32>
    %73 = math.tanh %72 : vector<2x32xf32>
    %74 = arith.mulf %69, %73 : vector<2x32xf32>
    %75 = vector.extract_strided_slice %14 {offsets = [3, 0, 0], sizes = [1, 2, 128], strides = [1, 1, 1]} : vector<8x2x128xf32> to vector<1x2x128xf32>
    %76 = vector.shape_cast %75 : vector<1x2x128xf32> to vector<2x128xf32>
    %cst_22 = arith.constant dense<0.000000e+00> : vector<2x128xf32>
    %77 = tpu.matmul %74, %15, %cst_22 {dimension_numbers = #tpu.dot_dimension_numbers<[1], [0], [0], [1], [0, 0, 1, 1], [], []>} : vector<2x32xf32>, vector<32x128xf32>, vector<2x128xf32> -> vector<2x128xf32>
    %78 = arith.addf %76, %77 : vector<2x128xf32>
    %79 = arith.negf %78 : vector<2x128xf32>
    %80 = math.exp %79 : vector<2x128xf32>
    %cst_23 = arith.constant 1.000000e+00 : f32
    %81 = vector.broadcast %cst_23 : f32 to vector<2x128xf32>
    %82 = arith.addf %81, %80 : vector<2x128xf32>
    %83 = arith.divf %81, %82 : vector<2x128xf32>
    %84 = math.tanh %78 : vector<2x128xf32>
    %85 = vector.extract_strided_slice %83 {offsets = [0, 0], sizes = [2, 32], strides = [1, 1]} : vector<2x128xf32> to vector<2x32xf32>
    %86 = vector.extract_strided_slice %83 {offsets = [0, 32], sizes = [2, 32], strides = [1, 1]} : vector<2x128xf32> to vector<2x32xf32>
    %87 = vector.extract_strided_slice %84 {offsets = [0, 64], sizes = [2, 32], strides = [1, 1]} : vector<2x128xf32> to vector<2x32xf32>
    %88 = vector.extract_strided_slice %83 {offsets = [0, 96], sizes = [2, 32], strides = [1, 1]} : vector<2x128xf32> to vector<2x32xf32>
    %89 = arith.mulf %86, %72 : vector<2x32xf32>
    %90 = arith.mulf %85, %87 : vector<2x32xf32>
    %91 = arith.addf %89, %90 : vector<2x32xf32>
    %92 = math.tanh %91 : vector<2x32xf32>
    %93 = arith.mulf %88, %92 : vector<2x32xf32>
    %94 = vector.extract_strided_slice %14 {offsets = [4, 0, 0], sizes = [1, 2, 128], strides = [1, 1, 1]} : vector<8x2x128xf32> to vector<1x2x128xf32>
    %95 = vector.shape_cast %94 : vector<1x2x128xf32> to vector<2x128xf32>
    %cst_24 = arith.constant dense<0.000000e+00> : vector<2x128xf32>
    %96 = tpu.matmul %93, %15, %cst_24 {dimension_numbers = #tpu.dot_dimension_numbers<[1], [0], [0], [1], [0, 0, 1, 1], [], []>} : vector<2x32xf32>, vector<32x128xf32>, vector<2x128xf32> -> vector<2x128xf32>
    %97 = arith.addf %95, %96 : vector<2x128xf32>
    %98 = arith.negf %97 : vector<2x128xf32>
    %99 = math.exp %98 : vector<2x128xf32>
    %cst_25 = arith.constant 1.000000e+00 : f32
    %100 = vector.broadcast %cst_25 : f32 to vector<2x128xf32>
    %101 = arith.addf %100, %99 : vector<2x128xf32>
    %102 = arith.divf %100, %101 : vector<2x128xf32>
    %103 = math.tanh %97 : vector<2x128xf32>
    %104 = vector.extract_strided_slice %102 {offsets = [0, 0], sizes = [2, 32], strides = [1, 1]} : vector<2x128xf32> to vector<2x32xf32>
    %105 = vector.extract_strided_slice %102 {offsets = [0, 32], sizes = [2, 32], strides = [1, 1]} : vector<2x128xf32> to vector<2x32xf32>
    %106 = vector.extract_strided_slice %103 {offsets = [0, 64], sizes = [2, 32], strides = [1, 1]} : vector<2x128xf32> to vector<2x32xf32>
    %107 = vector.extract_strided_slice %102 {offsets = [0, 96], sizes = [2, 32], strides = [1, 1]} : vector<2x128xf32> to vector<2x32xf32>
    %108 = arith.mulf %105, %91 : vector<2x32xf32>
    %109 = arith.mulf %104, %106 : vector<2x32xf32>
    %110 = arith.addf %108, %109 : vector<2x32xf32>
    %111 = math.tanh %110 : vector<2x32xf32>
    %112 = arith.mulf %107, %111 : vector<2x32xf32>
    %113 = vector.extract_strided_slice %14 {offsets = [5, 0, 0], sizes = [1, 2, 128], strides = [1, 1, 1]} : vector<8x2x128xf32> to vector<1x2x128xf32>
    %114 = vector.shape_cast %113 : vector<1x2x128xf32> to vector<2x128xf32>
    %cst_26 = arith.constant dense<0.000000e+00> : vector<2x128xf32>
    %115 = tpu.matmul %112, %15, %cst_26 {dimension_numbers = #tpu.dot_dimension_numbers<[1], [0], [0], [1], [0, 0, 1, 1], [], []>} : vector<2x32xf32>, vector<32x128xf32>, vector<2x128xf32> -> vector<2x128xf32>
    %116 = arith.addf %114, %115 : vector<2x128xf32>
    %117 = arith.negf %116 : vector<2x128xf32>
    %118 = math.exp %117 : vector<2x128xf32>
    %cst_27 = arith.constant 1.000000e+00 : f32
    %119 = vector.broadcast %cst_27 : f32 to vector<2x128xf32>
    %120 = arith.addf %119, %118 : vector<2x128xf32>
    %121 = arith.divf %119, %120 : vector<2x128xf32>
    %122 = math.tanh %116 : vector<2x128xf32>
    %123 = vector.extract_strided_slice %121 {offsets = [0, 0], sizes = [2, 32], strides = [1, 1]} : vector<2x128xf32> to vector<2x32xf32>
    %124 = vector.extract_strided_slice %121 {offsets = [0, 32], sizes = [2, 32], strides = [1, 1]} : vector<2x128xf32> to vector<2x32xf32>
    %125 = vector.extract_strided_slice %122 {offsets = [0, 64], sizes = [2, 32], strides = [1, 1]} : vector<2x128xf32> to vector<2x32xf32>
    %126 = vector.extract_strided_slice %121 {offsets = [0, 96], sizes = [2, 32], strides = [1, 1]} : vector<2x128xf32> to vector<2x32xf32>
    %127 = arith.mulf %124, %110 : vector<2x32xf32>
    %128 = arith.mulf %123, %125 : vector<2x32xf32>
    %129 = arith.addf %127, %128 : vector<2x32xf32>
    %130 = math.tanh %129 : vector<2x32xf32>
    %131 = arith.mulf %126, %130 : vector<2x32xf32>
    %132 = vector.extract_strided_slice %14 {offsets = [6, 0, 0], sizes = [1, 2, 128], strides = [1, 1, 1]} : vector<8x2x128xf32> to vector<1x2x128xf32>
    %133 = vector.shape_cast %132 : vector<1x2x128xf32> to vector<2x128xf32>
    %cst_28 = arith.constant dense<0.000000e+00> : vector<2x128xf32>
    %134 = tpu.matmul %131, %15, %cst_28 {dimension_numbers = #tpu.dot_dimension_numbers<[1], [0], [0], [1], [0, 0, 1, 1], [], []>} : vector<2x32xf32>, vector<32x128xf32>, vector<2x128xf32> -> vector<2x128xf32>
    %135 = arith.addf %133, %134 : vector<2x128xf32>
    %136 = arith.negf %135 : vector<2x128xf32>
    %137 = math.exp %136 : vector<2x128xf32>
    %cst_29 = arith.constant 1.000000e+00 : f32
    %138 = vector.broadcast %cst_29 : f32 to vector<2x128xf32>
    %139 = arith.addf %138, %137 : vector<2x128xf32>
    %140 = arith.divf %138, %139 : vector<2x128xf32>
    %141 = math.tanh %135 : vector<2x128xf32>
    %142 = vector.extract_strided_slice %140 {offsets = [0, 0], sizes = [2, 32], strides = [1, 1]} : vector<2x128xf32> to vector<2x32xf32>
    %143 = vector.extract_strided_slice %140 {offsets = [0, 32], sizes = [2, 32], strides = [1, 1]} : vector<2x128xf32> to vector<2x32xf32>
    %144 = vector.extract_strided_slice %141 {offsets = [0, 64], sizes = [2, 32], strides = [1, 1]} : vector<2x128xf32> to vector<2x32xf32>
    %145 = vector.extract_strided_slice %140 {offsets = [0, 96], sizes = [2, 32], strides = [1, 1]} : vector<2x128xf32> to vector<2x32xf32>
    %146 = arith.mulf %143, %129 : vector<2x32xf32>
    %147 = arith.mulf %142, %144 : vector<2x32xf32>
    %148 = arith.addf %146, %147 : vector<2x32xf32>
    %149 = math.tanh %148 : vector<2x32xf32>
    %150 = arith.mulf %145, %149 : vector<2x32xf32>
    %151 = vector.extract_strided_slice %14 {offsets = [7, 0, 0], sizes = [1, 2, 128], strides = [1, 1, 1]} : vector<8x2x128xf32> to vector<1x2x128xf32>
    %152 = vector.shape_cast %151 : vector<1x2x128xf32> to vector<2x128xf32>
    %cst_30 = arith.constant dense<0.000000e+00> : vector<2x128xf32>
    %153 = tpu.matmul %150, %15, %cst_30 {dimension_numbers = #tpu.dot_dimension_numbers<[1], [0], [0], [1], [0, 0, 1, 1], [], []>} : vector<2x32xf32>, vector<32x128xf32>, vector<2x128xf32> -> vector<2x128xf32>
    %154 = arith.addf %152, %153 : vector<2x128xf32>
    %155 = arith.negf %154 : vector<2x128xf32>
    %156 = math.exp %155 : vector<2x128xf32>
    %cst_31 = arith.constant 1.000000e+00 : f32
    %157 = vector.broadcast %cst_31 : f32 to vector<2x128xf32>
    %158 = arith.addf %157, %156 : vector<2x128xf32>
    %159 = arith.divf %157, %158 : vector<2x128xf32>
    %160 = math.tanh %154 : vector<2x128xf32>
    %161 = vector.extract_strided_slice %159 {offsets = [0, 0], sizes = [2, 32], strides = [1, 1]} : vector<2x128xf32> to vector<2x32xf32>
    %162 = vector.extract_strided_slice %159 {offsets = [0, 32], sizes = [2, 32], strides = [1, 1]} : vector<2x128xf32> to vector<2x32xf32>
    %163 = vector.extract_strided_slice %160 {offsets = [0, 64], sizes = [2, 32], strides = [1, 1]} : vector<2x128xf32> to vector<2x32xf32>
    %164 = vector.extract_strided_slice %159 {offsets = [0, 96], sizes = [2, 32], strides = [1, 1]} : vector<2x128xf32> to vector<2x32xf32>
    %165 = arith.mulf %162, %148 : vector<2x32xf32>
    %166 = arith.mulf %161, %163 : vector<2x32xf32>
    %167 = arith.addf %165, %166 : vector<2x32xf32>
    %168 = math.tanh %167 : vector<2x32xf32>
    %169 = arith.mulf %164, %168 : vector<2x32xf32>
    %170 = vector.extract_strided_slice %0 {offsets = [0, 0, 0], sizes = [1, 2, 6], strides = [1, 1, 1]} : vector<8x2x13xf32> to vector<1x2x6xf32>
    %171 = vector.shape_cast %170 : vector<1x2x6xf32> to vector<2x6xf32>
    %c0_32 = arith.constant 0 : index
    %c0_33 = arith.constant 0 : index
    %172 = vector.load %arg7[%c0_32, %c0_33] : memref<6x32xf32, #tpu.memory_space<vmem>>, vector<6x32xf32>
    %cst_34 = arith.constant dense<0.000000e+00> : vector<2x32xf32>
    %173 = tpu.matmul %171, %172, %cst_34 {dimension_numbers = #tpu.dot_dimension_numbers<[1], [0], [0], [1], [0, 0, 1, 1], [], []>} : vector<2x6xf32>, vector<6x32xf32>, vector<2x32xf32> -> vector<2x32xf32>
    %c0_35 = arith.constant 0 : index
    %c0_36 = arith.constant 0 : index
    %174 = vector.load %arg8[%c0_35, %c0_36] : memref<32x32xf32, #tpu.memory_space<vmem>>, vector<32x32xf32>
    %cst_37 = arith.constant dense<0.000000e+00> : vector<2x32xf32>
    %175 = tpu.matmul %169, %174, %cst_37 {dimension_numbers = #tpu.dot_dimension_numbers<[1], [0], [0], [1], [0, 0, 1, 1], [], []>} : vector<2x32xf32>, vector<32x32xf32>, vector<2x32xf32> -> vector<2x32xf32>
    %176 = arith.addf %173, %175 : vector<2x32xf32>
    %c0_38 = arith.constant 0 : index
    %c0_39 = arith.constant 0 : index
    %177 = vector.load %arg9[%c0_38, %c0_39] : memref<1x32xf32, #tpu.memory_space<vmem>>, vector<1x32xf32>
    %178 = vector.broadcast %177 : vector<1x32xf32> to vector<2x32xf32>
    %179 = arith.addf %176, %178 : vector<2x32xf32>
    %cst_40 = arith.constant 0.000000e+00 : f32
    %180 = vector.broadcast %cst_40 : f32 to vector<2x32xf32>
    %181 = arith.maximumf %179, %180 : vector<2x32xf32>
    %c0_41 = arith.constant 0 : index
    %c0_42 = arith.constant 0 : index
    %182 = vector.load %arg10[%c0_41, %c0_42] : memref<32x8xf32, #tpu.memory_space<vmem>>, vector<32x8xf32>
    %cst_43 = arith.constant dense<0.000000e+00> : vector<2x8xf32>
    %183 = tpu.matmul %181, %182, %cst_43 {dimension_numbers = #tpu.dot_dimension_numbers<[1], [0], [0], [1], [0, 0, 1, 1], [], []>} : vector<2x32xf32>, vector<32x8xf32>, vector<2x8xf32> -> vector<2x8xf32>
    %c0_44 = arith.constant 0 : index
    %c0_45 = arith.constant 0 : index
    %184 = vector.load %arg11[%c0_44, %c0_45] : memref<1x8xf32, #tpu.memory_space<vmem>>, vector<1x8xf32>
    %185 = vector.broadcast %184 : vector<1x8xf32> to vector<2x8xf32>
    %186 = arith.addf %183, %185 : vector<2x8xf32>
    %187 = tpu.transpose %186, [1, 0] : vector<2x8xf32> -> vector<8x2xf32>
    %c0_46 = arith.constant 0 : index
    %c0_47 = arith.constant 0 : index
    %c0_48 = arith.constant 0 : index
    %188 = vector.load %arg12[%c0_46, %c0_47, %c0_48] : memref<1x8x2xf32, #tpu.memory_space<vmem>>, vector<1x8x2xf32>
    %189 = vector.shape_cast %188 : vector<1x8x2xf32> to vector<8x2xf32>
    %190 = vector.shape_cast %187 : vector<8x2xf32> to vector<1x8x2xf32>
    tpu.vector_store %arg12[%c0_46, %c0_47, %c0_48], %190 {strides = array<i32>} : memref<1x8x2xf32, #tpu.memory_space<vmem>>, vector<1x8x2xf32>,
    return
  }
  func.func @transform_0(%arg0: i32) -> (i32, i32, i32) {
    %c0_i32 = arith.constant 0 : i32
    %c0_i32_0 = arith.constant 0 : i32
    %c0_i32_1 = arith.constant 0 : i32
    return %c0_i32, %arg0, %c0_i32_0 : i32, i32, i32
  }
  func.func @transform_1(%arg0: i32) -> (i32, i32) {
    %c0_i32 = arith.constant 0 : i32
    %c0_i32_0 = arith.constant 0 : i32
    %c0_i32_1 = arith.constant 0 : i32
    return %c0_i32, %c0_i32_0 : i32, i32
  }
  func.func @transform_2(%arg0: i32) -> (i32, i32) {
    %c0_i32 = arith.constant 0 : i32
    %c0_i32_0 = arith.constant 0 : i32
    %c0_i32_1 = arith.constant 0 : i32
    return %c0_i32, %c0_i32_0 : i32, i32
  }
  func.func @transform_3(%arg0: i32) -> (i32, i32) {
    %c0_i32 = arith.constant 0 : i32
    %c0_i32_0 = arith.constant 0 : i32
    %c0_i32_1 = arith.constant 0 : i32
    return %c0_i32, %c0_i32_0 : i32, i32
  }
  func.func @transform_4(%arg0: i32) -> (i32, i32) {
    %c0_i32 = arith.constant 0 : i32
    %c0_i32_0 = arith.constant 0 : i32
    %c0_i32_1 = arith.constant 0 : i32
    return %c0_i32, %c0_i32_0 : i32, i32
  }
  func.func @transform_5(%arg0: i32) -> (i32, i32) {
    %c0_i32 = arith.constant 0 : i32
    %c0_i32_0 = arith.constant 0 : i32
    %c0_i32_1 = arith.constant 0 : i32
    return %c0_i32, %c0_i32_0 : i32, i32
  }
  func.func @transform_6(%arg0: i32) -> (i32, i32) {
    %c0_i32 = arith.constant 0 : i32
    %c0_i32_0 = arith.constant 0 : i32
    %c0_i32_1 = arith.constant 0 : i32
    return %c0_i32, %c0_i32_0 : i32, i32
  }
  func.func @transform_7(%arg0: i32) -> (i32, i32) {
    %c0_i32 = arith.constant 0 : i32
    %c0_i32_0 = arith.constant 0 : i32
    %c0_i32_1 = arith.constant 0 : i32
    return %c0_i32, %c0_i32_0 : i32, i32
  }
  func.func @transform_8(%arg0: i32) -> (i32, i32) {
    %c0_i32 = arith.constant 0 : i32
    %c0_i32_0 = arith.constant 0 : i32
    %c0_i32_1 = arith.constant 0 : i32
    return %c0_i32, %c0_i32_0 : i32, i32
  }
  func.func @transform_9(%arg0: i32) -> (i32, i32) {
    %c0_i32 = arith.constant 0 : i32
    %c0_i32_0 = arith.constant 0 : i32
    %c0_i32_1 = arith.constant 0 : i32
    return %c0_i32, %c0_i32_0 : i32, i32
  }
  func.func @transform_10(%arg0: i32) -> (i32, i32) {
    %c0_i32 = arith.constant 0 : i32
    %c0_i32_0 = arith.constant 0 : i32
    %c0_i32_1 = arith.constant 0 : i32
    return %c0_i32, %c0_i32_0 : i32, i32
  }
  func.func @transform_11(%arg0: i32) -> (i32, i32, i32) {
    %c0_i32 = arith.constant 0 : i32
    %c0_i32_0 = arith.constant 0 : i32
    %c0_i32_1 = arith.constant 0 : i32
    return %arg0, %c0_i32, %c0_i32_0 : i32, i32, i32
  }
}

</mosaic_0001>

<llo_original>
// kernel: tpu_custom_call.1
$region0: #{tpu_custom_call.1}
  #allocation0 [shape = 'u32[]', space=smem, size = 0x4, offset = 0x4, fixed_abs, tag = 'smem constant byte address 0x4 - core index']
  #allocation1 [shape = 'u32[144,128]{1,0:T(1,128)}', space=vmem, size = 0x12000, scoped, tag = 'internal scratch']
  %s0 = inlined_call_operand.hbm [shape: f32[8,2,13], index: 0, kind: input, shape index: {}]
  %s1 = inlined_call_operand.hbm [shape: f32[13,32], index: 1, kind: input, shape index: {}]
  %s2 = inlined_call_operand.vmem [shape: f32[1,32], index: 2, kind: input, shape index: {}]
  %s3 = inlined_call_operand.vmem [shape: f32[32,128], index: 3, kind: input, shape index: {}]
  %s4 = inlined_call_operand.vmem [shape: f32[1,128], index: 4, kind: input, shape index: {}]
  %s5 = inlined_call_operand.hbm [shape: f32[32,128], index: 5, kind: input, shape index: {}]
  %s6 = inlined_call_operand.hbm [shape: f32[6,32], index: 6, kind: input, shape index: {}]
  %s7 = inlined_call_operand.vmem [shape: f32[32,32], index: 7, kind: input, shape index: {}]
  %s8 = inlined_call_operand.hbm [shape: f32[1,32], index: 8, kind: input, shape index: {}]
  %s9 = inlined_call_operand.vmem [shape: f32[32,8], index: 9, kind: input, shape index: {}]
  %s10 = inlined_call_operand.vmem [shape: f32[1,8], index: 10, kind: input, shape index: {}]
  %s11 = inlined_call_operand.vmem [shape: f32[1,8,2], index: 11, kind: output, shape index: {}]
  %s12 = sld [smem:[#allocation0]]
  $region74: #{tpu_custom_call.1} parent=0
    _
  %s14 = ssub.s32 1, %s12
  %s15 = scalar_select 0, %s14, %s12
  $region1: #{tpu_custom_call.1} parent=0
    #allocation2 [shape = 'u8[8192]{0}', space=vmem, size = 0x2000, scoped, tag = 'input window, operand 0, single buffered']
    #allocation3 [shape = 's32[1]{0}', space=sflag, size = 0x4, scoped, tag = 'scoped memory for tpu_custom_call.1']
    #allocation4 [shape = 'u8[8192]{0}', space=vmem, size = 0x2000, scoped, tag = 'input window, operand 1, single buffered']
    #allocation5 [shape = 's32[1]{0}', space=sflag, size = 0x4, scoped, tag = 'scoped memory for tpu_custom_call.1']
    #allocation6 [shape = 'u8[16384]{0}', space=vmem, size = 0x4000, scoped, tag = 'input window, operand 5, single buffered']
    #allocation7 [shape = 'u8[4096]{0}', space=vmem, size = 0x1000, scoped, tag = 'input window, operand 6, single buffered']
    #allocation8 [shape = 's32[1]{0}', space=sflag, size = 0x4, scoped, tag = 'scoped memory for tpu_custom_call.1']
    #allocation9 [shape = 'u8[512]{0}', space=vmem, size = 0x400, scoped, tag = 'input window, operand 8, single buffered']
    %16 = vsyncpa [#allocation3], 0
    %17 = vsyncpa [#allocation5], 0
    %18 = vsyncpa [#allocation8], 0
    // Predicated region
    $region2: #{tpu_custom_call.1} parent=1 // pred_check
      _
    $region3: #{tpu_custom_call.1} parent=1 // pred_check_branch
      %20 = sbr.rel (0) target = $region5
    $region4: #{tpu_custom_call.1} parent=1 // pred_region
      %s22 = ssub.s32 256, 256
      %23 = vsyncadd [#allocation3], %s22
      %s24 = sshll.u32 [#allocation2], 4
      %s25 = int_to_ptr.vmem [resolvable:$true] %s24
      %30 = dma.hbm_to_vmem [thread:$0]  %s0, 256, %s25, [#allocation3], 32, 32, 2
    $region5: #{tpu_custom_call.1} parent=1 // pred_fallthru
      _
    // Predicated region
    $region6: #{tpu_custom_call.1} parent=1 // pred_check
      _
    $region7: #{tpu_custom_call.1} parent=1 // pred_check_branch
      %32 = sbr.rel (0) target = $region9
    $region8: #{tpu_custom_call.1} parent=1 // pred_region
      %s34 = ssub.s32 256, 256
      %35 = vsyncadd [#allocation5], %s34
      %s36 = sshll.u32 [#allocation4], 4
      %s37 = int_to_ptr.vmem [resolvable:$true] %s36
      %42 = dma.hbm_to_vmem [thread:$0]  %s1, 256, %s37, [#allocation5], 128, 128, 8
    $region9: #{tpu_custom_call.1} parent=1 // pred_fallthru
      _
    // Predicated region
    $region10: #{tpu_custom_call.1} parent=1 // pred_check
      _
    $region11: #{tpu_custom_call.1} parent=1 // pred_check_branch
      %44 = sbr.rel (0) target = $region13
    $region12: #{tpu_custom_call.1} parent=1 // pred_region
      _
    $region13: #{tpu_custom_call.1} parent=1 // pred_fallthru
      _
    // Predicated region
    $region14: #{tpu_custom_call.1} parent=1 // pred_check
      _
    $region15: #{tpu_custom_call.1} parent=1 // pred_check_branch
      %46 = sbr.rel (0) target = $region17
    $region16: #{tpu_custom_call.1} parent=1 // pred_region
      _
    $region17: #{tpu_custom_call.1} parent=1 // pred_fallthru
      _
    // Predicated region
    $region18: #{tpu_custom_call.1} parent=1 // pred_check
      _
    $region19: #{tpu_custom_call.1} parent=1 // pred_check_branch
      %48 = sbr.rel (0) target = $region21
    $region20: #{tpu_custom_call.1} parent=1 // pred_region
      _
    $region21: #{tpu_custom_call.1} parent=1 // pred_fallthru
      _
    // Predicated region
    $region22: #{tpu_custom_call.1} parent=1 // pred_check
      _
    $region23: #{tpu_custom_call.1} parent=1 // pred_check_branch
      %50 = sbr.rel (0) target = $region25
    $region24: #{tpu_custom_call.1} parent=1 // pred_region
      %s52 = ssub.s32 512, 512
      %53 = vsyncadd [#allocation5], %s52
      %s54 = sshll.u32 [#allocation6], 4
      %s55 = int_to_ptr.vmem [resolvable:$true] %s54
      %60 = dma.hbm_to_vmem [thread:$0]  %s5, 512, %s55, [#allocation5], 128, 128, 8
    $region25: #{tpu_custom_call.1} parent=1 // pred_fallthru
      _
    // Predicated region
    $region26: #{tpu_custom_call.1} parent=1 // pred_check
      _
    $region27: #{tpu_custom_call.1} parent=1 // pred_check_branch
      %62 = sbr.rel (0) target = $region29
    $region28: #{tpu_custom_call.1} parent=1 // pred_region
      %s64 = ssub.s32 128, 128
      %65 = vsyncadd [#allocation8], %s64
      %s67 = sshll.u32 [#allocation7], 4
      %s68 = int_to_ptr.vmem [resolvable:$true] %s67
      %70 = dma.hbm_to_vmem [thread:$0]  %s6, 128, %s68, [#allocation8]
    $region29: #{tpu_custom_call.1} parent=1 // pred_fallthru
      _
    // Predicated region
    $region30: #{tpu_custom_call.1} parent=1 // pred_check
      _
    $region31: #{tpu_custom_call.1} parent=1 // pred_check_branch
      %72 = sbr.rel (0) target = $region33
    $region32: #{tpu_custom_call.1} parent=1 // pred_region
      _
    $region33: #{tpu_custom_call.1} parent=1 // pred_fallthru
      _
    // Predicated region
    $region34: #{tpu_custom_call.1} parent=1 // pred_check
      _
    $region35: #{tpu_custom_call.1} parent=1 // pred_check_branch
      %74 = sbr.rel (0) target = $region37
    $region36: #{tpu_custom_call.1} parent=1 // pred_region
      %s76 = ssub.s32 16, 16
      %77 = vsyncadd [#allocation8], %s76
      %s79 = sshll.u32 [#allocation9], 4
      %s80 = int_to_ptr.vmem [resolvable:$true] %s79
      %82 = dma.hbm_to_vmem [thread:$0]  %s8, 16, %s80, [#allocation8]
    $region37: #{tpu_custom_call.1} parent=1 // pred_fallthru
      _
    // Predicated region
    $region38: #{tpu_custom_call.1} parent=1 // pred_check
      _
    $region39: #{tpu_custom_call.1} parent=1 // pred_check_branch
      %84 = sbr.rel (0) target = $region41
    $region40: #{tpu_custom_call.1} parent=1 // pred_region
      _
    $region41: #{tpu_custom_call.1} parent=1 // pred_fallthru
      _
    // Predicated region
    $region42: #{tpu_custom_call.1} parent=1 // pred_check
      _
    $region43: #{tpu_custom_call.1} parent=1 // pred_check_branch
      %86 = sbr.rel (0) target = $region45
    $region44: #{tpu_custom_call.1} parent=1 // pred_region
      _
    $region45: #{tpu_custom_call.1} parent=1 // pred_fallthru
      _
    // Predicated region
    $region46: #{tpu_custom_call.1} parent=1 // pred_check
      _
    $region47: #{tpu_custom_call.1} parent=1 // pred_check_branch
      %88 = sbr.rel (0) target = $region49
    $region48: #{tpu_custom_call.1} parent=1 // pred_region
      %89 = dma.done [#allocation3], 256
    $region49: #{tpu_custom_call.1} parent=1 // pred_fallthru
      _
    // Predicated region
    $region50: #{tpu_custom_call.1} parent=1 // pred_check
      _
    $region51: #{tpu_custom_call.1} parent=1 // pred_check_branch
      %91 = sbr.rel (0) target = $region53
    $region52: #{tpu_custom_call.1} parent=1 // pred_region
      %92 = dma.done [#allocation5], 256
    $region53: #{tpu_custom_call.1} parent=1 // pred_fallthru
      _
    // Predicated region
    $region54: #{tpu_custom_call.1} parent=1 // pred_check
      _
    $region55: #{tpu_custom_call.1} parent=1 // pred_check_branch
      %94 = sbr.rel (0) target = $region57
    $region56: #{tpu_custom_call.1} parent=1 // pred_region
      %95 = dma.done [#allocation5], 512
    $region57: #{tpu_custom_call.1} parent=1 // pred_fallthru
      _
    // Predicated region
    $region58: #{tpu_custom_call.1} parent=1 // pred_check
      _
    $region59: #{tpu_custom_call.1} parent=1 // pred_check_branch
      %97 = sbr.rel (0) target = $region61
    $region60: #{tpu_custom_call.1} parent=1 // pred_region
      %98 = dma.done [#allocation8], 128
    $region61: #{tpu_custom_call.1} parent=1 // pred_fallthru
      _
    // Predicated region
    $region62: #{tpu_custom_call.1} parent=1 // pred_check
      _
    $region63: #{tpu_custom_call.1} parent=1 // pred_check_branch
      %100 = sbr.rel (0) target = $region65
    $region64: #{tpu_custom_call.1} parent=1 // pred_region
      %101 = dma.done [#allocation8], 16
    $region65: #{tpu_custom_call.1} parent=1 // pred_fallthru
      _
    %v102 = vld [vmem:[#allocation2] sm:$0x3]
    %v103 = vld [vmem:[#allocation2 + $0x2] sm:$0x3]
    %v104 = vld [vmem:[#allocation2 + $0x4] sm:$0x3]
    %v105 = vld [vmem:[#allocation2 + $0x6] sm:$0x3]
    %v106 = vld [vmem:[#allocation2 + $0x8] sm:$0x3]
    %v107 = vld [vmem:[#allocation2 + $0xa] sm:$0x3]
    %v108 = vld [vmem:[#allocation2 + $0xc] sm:$0x3]
    %v109 = vld [vmem:[#allocation2 + $0xe] sm:$0x3]
    %v110 = vld [vmem:[#allocation4] sm:$0xff]
    %v111 = vld [vmem:[#allocation4 + $0x8] sm:$0x1f]
    %v112 = vld [vmem:[%s2] sm:$0x1]
    %v114 = vlaneseq
    %v115 = vshrl.u32 %v114, 7
    %v116 = vsub.s32 0, %v115
    %v117 = vrot.slane %v112, %v116
    %v127 = vcombine.low %v102, %v103
    %v128 = vcombine.low %v104, %v105
    %v130 = vunpack.c.l.s4 1983009808
    %v131 = vunpack.c.0.s8 %v130
    %v132 = vlaneseq
    %v133 = vshrl.u32 %v132, 7
    %v134 = vsub.s32 %v131, %v133
    %v135 = vrot.slane %v127, %v134
    %v137 = vunpack.c.l.s4 1983009808
    %v138 = vunpack.c.0.s8 %v137
    %v139 = vlaneseq
    %v140 = vshrl.u32 %v139, 7
    %v141 = vsub.s32 %v138, %v140
    %v142 = vrot.slane %v128, %v141
    %v143 = vcombine.low %v135, %v142
    %v144 = vcombine.low %v106, %v107
    %v145 = vcombine.low %v108, %v109
    %v147 = vunpack.c.l.s4 1983009808
    %v148 = vunpack.c.0.s8 %v147
    %v149 = vlaneseq
    %v150 = vshrl.u32 %v149, 7
    %v151 = vsub.s32 %v148, %v150
    %v152 = vrot.slane %v144, %v151
    %v154 = vunpack.c.l.s4 1983009808
    %v155 = vunpack.c.0.s8 %v154
    %v156 = vlaneseq
    %v157 = vshrl.u32 %v156, 7
    %v158 = vsub.s32 %v155, %v157
    %v159 = vrot.slane %v145, %v158
    %v160 = vcombine.low %v152, %v159
    %vm161 = vcmask 105472
    %v162 = vsel %vm161, %v143, 0
    %v164 = vsel %vm161, %v160, 0
    %vm166 = vcmask 1044480
    %v168 = vsel %vm166, %v111, 0
    %170 = vmatprep.subr.mxu0 0.0
    %171 = vmatpush1.msra.mxu0 %v110
    %172 = vmatprep.subr.mxu0 0.0
    %173 = vmatpush1.msra.mxu0 %v168
    %174 = vmatprep.subr.mxu0 0.0
    %175 = vmatpush1.msra.mxu0 0.0
    %176 = vmatprep.subr.mxu0 0.0
    %177 = vmatpush1.msra.mxu0 0.0
    %178 = vmatprep.subr.mxu0 0.0
    %179 = vmatpush1.msra.mxu0 0.0
    %180 = vmatprep.subr.mxu0 0.0
    %181 = vmatpush1.msra.mxu0 0.0
    %182 = vmatprep.subr.mxu0 0.0
    %183 = vmatpush1.msra.mxu0 0.0
    %184 = vmatprep.subr.mxu0 0.0
    %185 = vmatpush1.msra.mxu0 0.0
    %186 = vmatprep.subr.mxu0 0.0
    %187 = vmatpush1.msra.mxu0 0.0
    %188 = vmatprep.subr.mxu0 0.0
    %189 = vmatpush1.msra.mxu0 0.0
    %190 = vmatprep.subr.mxu0 0.0
    %191 = vmatpush1.msra.mxu0 0.0
    %192 = vmatprep.subr.mxu0 0.0
    %193 = vmatpush1.msra.mxu0 0.0
    %194 = vmatprep.subr.mxu0 0.0
    %195 = vmatpush1.msra.mxu0 0.0
    %196 = vmatprep.subr.mxu0 0.0
    %197 = vmatpush1.msra.mxu0 0.0
    %198 = vmatprep.subr.mxu0 0.0
    %199 = vmatpush1.msra.mxu0 0.0
    %200 = vmatprep.subr.mxu0 0.0
    %201 = vmatpush1.msra.mxu0 0.0
    %202 = vmatprep.subr.mxu0 0.0
    %203 = vmatpush1.msra.mxu0 0.0
    %204 = vmatprep.subr.mxu0 0.0
    %205 = vmatpush1.msra.mxu0 0.0
    %206 = vmatprep.subr.mxu0 0.0
    %207 = vmatpush1.msra.mxu0 0.0
    %208 = vmatprep.subr.mxu0 0.0
    %209 = vmatpush1.msra.mxu0 0.0
    %210 = vmatprep.subr.mxu0 0.0
    %211 = vmatpush1.msra.mxu0 0.0
    %212 = vmatprep.subr.mxu0 0.0
    %213 = vmatpush1.msra.mxu0 0.0
    %214 = vmatprep.subr.mxu0 0.0
    %215 = vmatpush1.msra.mxu0 0.0
    %216 = vmatprep.subr.mxu0 0.0
    %217 = vmatpush1.msra.mxu0 0.0
    %218 = vmatprep.subr.mxu0 0.0
    %219 = vmatpush1.msra.mxu0 0.0
    %220 = vmatprep.subr.mxu0 0.0
    %221 = vmatpush1.msra.mxu0 0.0
    %222 = vmatprep.subr.mxu0 0.0
    %223 = vmatpush1.msra.mxu0 0.0
    %224 = vmatprep.subr.mxu0 0.0
    %225 = vmatpush1.msra.mxu0 0.0
    %226 = vmatprep.subr.mxu0 0.0
    %227 = vmatpush1.msra.mxu0 0.0
    %228 = vmatprep.subr.mxu0 0.0
    %229 = vmatpush1.msra.mxu0 0.0
    %230 = vmatprep.subr.mxu0 0.0
    %231 = vmatpush1.msra.mxu0 0.0
    %232 = vmatprep.subr.mxu0 0.0
    %233 = vmatpush1.msra.mxu0 0.0
    %234 = vmatprep.mubr.f32.mxu0 0.0
    %235 = vmatmul.mubr.f32.gmra.mrb[0].mxu0 %v162
    %v236 = vpop.f32.mrb[0].mxu0
    %v237 = vadd.f32 %v117, %v236
    %v238 = vpop.f32.mrb[0].mxu0
    %239 = vmatprep.mubr.f32.mxu0 0.0
    %240 = vmatmul.mubr.f32.gmra.mrb[0].mxu0 %v164
    %v241 = vpop.f32.mrb[0].mxu0
    %v242 = vadd.f32 %v117, %v241
    %v243 = vpop.f32.mrb[0].mxu0
    %244 = vdwg.mxu0
    %v245 = vmax.f32 %v237, 0.0
    %v246 = vmax.f32 %v242, 0.0
    %v247 = vld [vmem:[%s3] sm:$0xff]
    %v248 = vld [vmem:[%s3 + $0x8] sm:$0xff]
    %v249 = vld [vmem:[%s3 + $0x10] sm:$0xff]
    %v250 = vld [vmem:[%s3 + $0x18] sm:$0xff]
    %v251 = vld [vmem:[%s4] sm:$0x1]
    %v253 = vlaneseq
    %v254 = vshrl.u32 %v253, 7
    %v255 = vsub.s32 0, %v254
    %v256 = vrot.slane %v251, %v255
    %vm258 = vcmask 261120
    %v260 = vsel %vm258, %v245, 0
    %v263 = vsel %vm258, %v246, 0
    %265 = vmatprep.subr.mxu0 0.0
    %266 = vmatpush1.msra.mxu0 %v247
    %267 = vmatprep.subr.mxu0 0.0
    %268 = vmatpush1.msra.mxu0 %v248
    %269 = vmatprep.subr.mxu0 0.0
    %270 = vmatpush1.msra.mxu0 %v249
    %271 = vmatprep.subr.mxu0 0.0
    %272 = vmatpush1.msra.mxu0 %v250
    %273 = vmatprep.subr.mxu0 0.0
    %274 = vmatpush1.msra.mxu0 0.0
    %275 = vmatprep.subr.mxu0 0.0
    %276 = vmatpush1.msra.mxu0 0.0
    %277 = vmatprep.subr.mxu0 0.0
    %278 = vmatpush1.msra.mxu0 0.0
    %279 = vmatprep.subr.mxu0 0.0
    %280 = vmatpush1.msra.mxu0 0.0
    %281 = vmatprep.subr.mxu0 0.0
    %282 = vmatpush1.msra.mxu0 0.0
    %283 = vmatprep.subr.mxu0 0.0
    %284 = vmatpush1.msra.mxu0 0.0
    %285 = vmatprep.subr.mxu0 0.0
    %286 = vmatpush1.msra.mxu0 0.0
    %287 = vmatprep.subr.mxu0 0.0
    %288 = vmatpush1.msra.mxu0 0.0
    %289 = vmatprep.subr.mxu0 0.0
    %290 = vmatpush1.msra.mxu0 0.0
    %291 = vmatprep.subr.mxu0 0.0
    %292 = vmatpush1.msra.mxu0 0.0
    %293 = vmatprep.subr.mxu0 0.0
    %294 = vmatpush1.msra.mxu0 0.0
    %295 = vmatprep.subr.mxu0 0.0
    %296 = vmatpush1.msra.mxu0 0.0
    %297 = vmatprep.subr.mxu0 0.0
    %298 = vmatpush1.msra.mxu0 0.0
    %299 = vmatprep.subr.mxu0 0.0
    %300 = vmatpush1.msra.mxu0 0.0
    %301 = vmatprep.subr.mxu0 0.0
    %302 = vmatpush1.msra.mxu0 0.0
    %303 = vmatprep.subr.mxu0 0.0
    %304 = vmatpush1.msra.mxu0 0.0
    %305 = vmatprep.subr.mxu0 0.0
    %306 = vmatpush1.msra.mxu0 0.0
    %307 = vmatprep.subr.mxu0 0.0
    %308 = vmatpush1.msra.mxu0 0.0
    %309 = vmatprep.subr.mxu0 0.0
    %310 = vmatpush1.msra.mxu0 0.0
    %311 = vmatprep.subr.mxu0 0.0
    %312 = vmatpush1.msra.mxu0 0.0
    %313 = vmatprep.subr.mxu0 0.0
    %314 = vmatpush1.msra.mxu0 0.0
    %315 = vmatprep.subr.mxu0 0.0
    %316 = vmatpush1.msra.mxu0 0.0
    %317 = vmatprep.subr.mxu0 0.0
    %318 = vmatpush1.msra.mxu0 0.0
    %319 = vmatprep.subr.mxu0 0.0
    %320 = vmatpush1.msra.mxu0 0.0
    %321 = vmatprep.subr.mxu0 0.0
    %322 = vmatpush1.msra.mxu0 0.0
    %323 = vmatprep.subr.mxu0 0.0
    %324 = vmatpush1.msra.mxu0 0.0
    %325 = vmatprep.subr.mxu0 0.0
    %326 = vmatpush1.msra.mxu0 0.0
    %327 = vmatprep.subr.mxu0 0.0
    %328 = vmatpush1.msra.mxu0 0.0
    %329 = vmatprep.mubr.f32.mxu0 0.0
    %330 = vmatmul.mubr.f32.gmra.mrb[0].mxu0 %v260
    %v331 = vpop.f32.mrb[0].mxu0
    %v332 = vadd.f32 %v256, %v331
    %v333 = vpop.f32.mrb[0].mxu0
    %334 = vmatprep.mubr.f32.mxu0 0.0
    %335 = vmatmul.mubr.f32.gmra.mrb[0].mxu0 %v263
    %v336 = vpop.f32.mrb[0].mxu0
    %v337 = vadd.f32 %v256, %v336
    %v338 = vpop.f32.mrb[0].mxu0
    %339 = vdwg.mxu0
    %v342 = vcombine.high %v332, %v332
    %v344 = vunpack.c.l.s4 1983009808
    %v345 = vunpack.c.0.s8 %v344
    %v346 = vlaneseq
    %v347 = vshrl.u32 %v346, 7
    %v348 = vsub.s32 %v345, %v347
    %v349 = vrot.slane %v332, %v348
    %v351 = vunpack.c.l.s4 1983009808
    %v352 = vunpack.c.0.s8 %v351
    %v353 = vlaneseq
    %v354 = vshrl.u32 %v353, 7
    %v355 = vsub.s32 %v352, %v354
    %v356 = vrot.slane %v342, %v355
    %v357 = vcombine.high %v349, %v349
    %v358 = vcombine.high %v356, %v356
    %v359 = vcombine.high %v337, %v337
    %v361 = vunpack.c.l.s4 1983009808
    %v362 = vunpack.c.0.s8 %v361
    %v363 = vlaneseq
    %v364 = vshrl.u32 %v363, 7
    %v365 = vsub.s32 %v362, %v364
    %v366 = vrot.slane %v337, %v365
    %v368 = vunpack.c.l.s4 1983009808
    %v369 = vunpack.c.0.s8 %v368
    %v370 = vlaneseq
    %v371 = vshrl.u32 %v370, 7
    %v372 = vsub.s32 %v369, %v371
    %v373 = vrot.slane %v359, %v372
    %v374 = vcombine.high %v366, %v366
    %v375 = vcombine.high %v373, %v373
    %v384 = vld [vmem:[#allocation6] sm:$0xff]
    %v385 = vld [vmem:[#allocation6 + $0x8] sm:$0xff]
    %v386 = vld [vmem:[#allocation6 + $0x10] sm:$0xff]
    %v387 = vld [vmem:[#allocation6 + $0x18] sm:$0xff]
    %v389 = vsel %vm258, 0.0, 0
    %391 = vmatprep.subr.mxu0 0.0
    %392 = vmatpush1.msra.mxu0 %v384
    %393 = vmatprep.subr.mxu0 0.0
    %394 = vmatpush1.msra.mxu0 %v385
    %395 = vmatprep.subr.mxu0 0.0
    %396 = vmatpush1.msra.mxu0 %v386
    %397 = vmatprep.subr.mxu0 0.0
    %398 = vmatpush1.msra.mxu0 %v387
    %399 = vmatprep.subr.mxu0 0.0
    %400 = vmatpush1.msra.mxu0 0.0
    %401 = vmatprep.subr.mxu0 0.0
    %402 = vmatpush1.msra.mxu0 0.0
    %403 = vmatprep.subr.mxu0 0.0
    %404 = vmatpush1.msra.mxu0 0.0
    %405 = vmatprep.subr.mxu0 0.0
    %406 = vmatpush1.msra.mxu0 0.0
    %407 = vmatprep.subr.mxu0 0.0
    %408 = vmatpush1.msra.mxu0 0.0
    %409 = vmatprep.subr.mxu0 0.0
    %410 = vmatpush1.msra.mxu0 0.0
    %411 = vmatprep.subr.mxu0 0.0
    %412 = vmatpush1.msra.mxu0 0.0
    %413 = vmatprep.subr.mxu0 0.0
    %414 = vmatpush1.msra.mxu0 0.0
    %415 = vmatprep.subr.mxu0 0.0
    %416 = vmatpush1.msra.mxu0 0.0
    %417 = vmatprep.subr.mxu0 0.0
    %418 = vmatpush1.msra.mxu0 0.0
    %419 = vmatprep.subr.mxu0 0.0
    %420 = vmatpush1.msra.mxu0 0.0
    %421 = vmatprep.subr.mxu0 0.0
    %422 = vmatpush1.msra.mxu0 0.0
    %423 = vmatprep.subr.mxu0 0.0
    %424 = vmatpush1.msra.mxu0 0.0
    %425 = vmatprep.subr.mxu0 0.0
    %426 = vmatpush1.msra.mxu0 0.0
    %427 = vmatprep.subr.mxu0 0.0
    %428 = vmatpush1.msra.mxu0 0.0
    %429 = vmatprep.subr.mxu0 0.0
    %430 = vmatpush1.msra.mxu0 0.0
    %431 = vmatprep.subr.mxu0 0.0
    %432 = vmatpush1.msra.mxu0 0.0
    %433 = vmatprep.subr.mxu0 0.0
    %434 = vmatpush1.msra.mxu0 0.0
    %435 = vmatprep.subr.mxu0 0.0
    %436 = vmatpush1.msra.mxu0 0.0
    %437 = vmatprep.subr.mxu0 0.0
    %438 = vmatpush1.msra.mxu0 0.0
    %439 = vmatprep.subr.mxu0 0.0
    %440 = vmatpush1.msra.mxu0 0.0
    %441 = vmatprep.subr.mxu0 0.0
    %442 = vmatpush1.msra.mxu0 0.0
    %443 = vmatprep.subr.mxu0 0.0
    %444 = vmatpush1.msra.mxu0 0.0
    %445 = vmatprep.subr.mxu0 0.0
    %446 = vmatpush1.msra.mxu0 0.0
    %447 = vmatprep.subr.mxu0 0.0
    %448 = vmatpush1.msra.mxu0 0.0
    %449 = vmatprep.subr.mxu0 0.0
    %450 = vmatpush1.msra.mxu0 0.0
    %451 = vmatprep.subr.mxu0 0.0
    %452 = vmatpush1.msra.mxu0 0.0
    %453 = vmatprep.subr.mxu0 0.0
    %454 = vmatpush1.msra.mxu0 0.0
    %455 = vmatprep.mubr.f32.mxu0 0.0
    %456 = vmatmul.mubr.f32.gmra.mrb[0].mxu0 %v389
    %v457 = vpop.f32.mrb[0].mxu0
    %v458 = vadd.f32 0.0, %v457
    %v459 = vpop.f32.mrb[0].mxu0
    %460 = vdwg.mxu0
    %v461 = vadd.f32 %v349, %v458
    %v462 = vxor.u32 %v461, 2147483648
    %v463 = vmul.f32 %v462, 1.442695
    %v464 = vpow.pop %v463
    %v465 = vadd.f32 %v464, 1.0
    %v466 = vrcp.pop %v465
    %v467 = vmul.f32 1.0, %v466
    %v468 = vtanh.pop %v461
    %v469 = vmul.f32 %v467, 0.0
    %471 = vrot.lane.b32.xlu0 %v468, 64
    %v472 = vpop.permute.xlu0 %471
    %v474 = vmul.f32 %v467, %v472
    %476 = vrot.lane.b32.xlu0 %v474, 32
    %v477 = vpop.permute.xlu0 %476
    %v479 = vadd.f32 %v469, %v477
    %v480 = vtanh.pop %v479
    %482 = vrot.lane.b32.xlu0 %v480, 64
    %v483 = vpop.permute.xlu0 %482
    %v485 = vmul.f32 %v467, %v483
    %v488 = vunpack.c.l.s4 1983009808
    %v489 = vunpack.c.0.s8 %v488
    %v490 = vlaneseq
    %v491 = vshrl.u32 %v490, 7
    %v492 = vsub.s32 %v489, %v491
    %v493 = vrot.slane %v485, %v492
    %494 = vrot.lane.b32.xlu0 %v493, 32
    %v495 = vpop.permute.xlu0 %494
    %v496 = vsel %vm258, %v495, 0
    %498 = vmatprep.subr.mxu0 0.0
    %499 = vmatpush1.msra.mxu0 %v384
    %500 = vmatprep.subr.mxu0 0.0
    %501 = vmatpush1.msra.mxu0 %v385
    %502 = vmatprep.subr.mxu0 0.0
    %503 = vmatpush1.msra.mxu0 %v386
    %504 = vmatprep.subr.mxu0 0.0
    %505 = vmatpush1.msra.mxu0 %v387
    %506 = vmatprep.subr.mxu0 0.0
    %507 = vmatpush1.msra.mxu0 0.0
    %508 = vmatprep.subr.mxu0 0.0
    %509 = vmatpush1.msra.mxu0 0.0
    %510 = vmatprep.subr.mxu0 0.0
    %511 = vmatpush1.msra.mxu0 0.0
    %512 = vmatprep.subr.mxu0 0.0
    %513 = vmatpush1.msra.mxu0 0.0
    %514 = vmatprep.subr.mxu0 0.0
    %515 = vmatpush1.msra.mxu0 0.0
    %516 = vmatprep.subr.mxu0 0.0
    %517 = vmatpush1.msra.mxu0 0.0
    %518 = vmatprep.subr.mxu0 0.0
    %519 = vmatpush1.msra.mxu0 0.0
    %520 = vmatprep.subr.mxu0 0.0
    %521 = vmatpush1.msra.mxu0 0.0
    %522 = vmatprep.subr.mxu0 0.0
    %523 = vmatpush1.msra.mxu0 0.0
    %524 = vmatprep.subr.mxu0 0.0
    %525 = vmatpush1.msra.mxu0 0.0
    %526 = vmatprep.subr.mxu0 0.0
    %527 = vmatpush1.msra.mxu0 0.0
    %528 = vmatprep.subr.mxu0 0.0
    %529 = vmatpush1.msra.mxu0 0.0
    %530 = vmatprep.subr.mxu0 0.0
    %531 = vmatpush1.msra.mxu0 0.0
    %532 = vmatprep.subr.mxu0 0.0
    %533 = vmatpush1.msra.mxu0 0.0
    %534 = vmatprep.subr.mxu0 0.0
    %535 = vmatpush1.msra.mxu0 0.0
    %536 = vmatprep.subr.mxu0 0.0
    %537 = vmatpush1.msra.mxu0 0.0
    %538 = vmatprep.subr.mxu0 0.0
    %539 = vmatpush1.msra.mxu0 0.0
    %540 = vmatprep.subr.mxu0 0.0
    %541 = vmatpush1.msra.mxu0 0.0
    %542 = vmatprep.subr.mxu0 0.0
    %543 = vmatpush1.msra.mxu0 0.0
    %544 = vmatprep.subr.mxu0 0.0
    %545 = vmatpush1.msra.mxu0 0.0
    %546 = vmatprep.subr.mxu0 0.0
    %547 = vmatpush1.msra.mxu0 0.0
    %548 = vmatprep.subr.mxu0 0.0
    %549 = vmatpush1.msra.mxu0 0.0
    %550 = vmatprep.subr.mxu0 0.0
    %551 = vmatpush1.msra.mxu0 0.0
    %552 = vmatprep.subr.mxu0 0.0
    %553 = vmatpush1.msra.mxu0 0.0
    %554 = vmatprep.subr.mxu0 0.0
    %555 = vmatpush1.msra.mxu0 0.0
    %556 = vmatprep.subr.mxu0 0.0
    %557 = vmatpush1.msra.mxu0 0.0
    %558 = vmatprep.subr.mxu0 0.0
    %559 = vmatpush1.msra.mxu0 0.0
    %560 = vmatprep.subr.mxu0 0.0
    %561 = vmatpush1.msra.mxu0 0.0
    %562 = vmatprep.mubr.f32.mxu0 0.0
    %563 = vmatmul.mubr.f32.gmra.mrb[0].mxu0 %v496
    %v564 = vpop.f32.mrb[0].mxu0
    %v565 = vadd.f32 0.0, %v564
    %v566 = vpop.f32.mrb[0].mxu0
    %567 = vdwg.mxu0
    %v568 = vadd.f32 %v357, %v565
    %v569 = vxor.u32 %v568, 2147483648
    %v570 = vmul.f32 %v569, 1.442695
    %v571 = vpow.pop %v570
    %v572 = vadd.f32 %v571, 1.0
    %v573 = vrcp.pop %v572
    %v574 = vmul.f32 1.0, %v573
    %v575 = vtanh.pop %v568
    %v576 = vmul.f32 %v574, %v479
    %578 = vrot.lane.b32.xlu0 %v575, 64
    %v579 = vpop.permute.xlu0 %578
    %v581 = vmul.f32 %v574, %v579
    %583 = vrot.lane.b32.xlu0 %v581, 32
    %v584 = vpop.permute.xlu0 %583
    %v586 = vadd.f32 %v576, %v584
    %v587 = vtanh.pop %v586
    %589 = vrot.lane.b32.xlu0 %v587, 64
    %v590 = vpop.permute.xlu0 %589
    %v592 = vmul.f32 %v574, %v590
    %v595 = vunpack.c.l.s4 1983009808
    %v596 = vunpack.c.0.s8 %v595
    %v597 = vlaneseq
    %v598 = vshrl.u32 %v597, 7
    %v599 = vsub.s32 %v596, %v598
    %v600 = vrot.slane %v592, %v599
    %601 = vrot.lane.b32.xlu0 %v600, 32
    %v602 = vpop.permute.xlu0 %601
    %v603 = vsel %vm258, %v602, 0
    %605 = vmatprep.subr.mxu0 0.0
    %606 = vmatpush1.msra.mxu0 %v384
    %607 = vmatprep.subr.mxu0 0.0
    %608 = vmatpush1.msra.mxu0 %v385
    %609 = vmatprep.subr.mxu0 0.0
    %610 = vmatpush1.msra.mxu0 %v386
    %611 = vmatprep.subr.mxu0 0.0
    %612 = vmatpush1.msra.mxu0 %v387
    %613 = vmatprep.subr.mxu0 0.0
    %614 = vmatpush1.msra.mxu0 0.0
    %615 = vmatprep.subr.mxu0 0.0
    %616 = vmatpush1.msra.mxu0 0.0
    %617 = vmatprep.subr.mxu0 0.0
    %618 = vmatpush1.msra.mxu0 0.0
    %619 = vmatprep.subr.mxu0 0.0
    %620 = vmatpush1.msra.mxu0 0.0
    %621 = vmatprep.subr.mxu0 0.0
    %622 = vmatpush1.msra.mxu0 0.0
    %623 = vmatprep.subr.mxu0 0.0
    %624 = vmatpush1.msra.mxu0 0.0
    %625 = vmatprep.subr.mxu0 0.0
    %626 = vmatpush1.msra.mxu0 0.0
    %627 = vmatprep.subr.mxu0 0.0
    %628 = vmatpush1.msra.mxu0 0.0
    %629 = vmatprep.subr.mxu0 0.0
    %630 = vmatpush1.msra.mxu0 0.0
    %631 = vmatprep.subr.mxu0 0.0
    %632 = vmatpush1.msra.mxu0 0.0
    %633 = vmatprep.subr.mxu0 0.0
    %634 = vmatpush1.msra.mxu0 0.0
    %635 = vmatprep.subr.mxu0 0.0
    %636 = vmatpush1.msra.mxu0 0.0
    %637 = vmatprep.subr.mxu0 0.0
    %638 = vmatpush1.msra.mxu0 0.0
    %639 = vmatprep.subr.mxu0 0.0
    %640 = vmatpush1.msra.mxu0 0.0
    %641 = vmatprep.subr.mxu0 0.0
    %642 = vmatpush1.msra.mxu0 0.0
    %643 = vmatprep.subr.mxu0 0.0
    %644 = vmatpush1.msra.mxu0 0.0
    %645 = vmatprep.subr.mxu0 0.0
    %646 = vmatpush1.msra.mxu0 0.0
    %647 = vmatprep.subr.mxu0 0.0
    %648 = vmatpush1.msra.mxu0 0.0
    %649 = vmatprep.subr.mxu0 0.0
    %650 = vmatpush1.msra.mxu0 0.0
    %651 = vmatprep.subr.mxu0 0.0
    %652 = vmatpush1.msra.mxu0 0.0
    %653 = vmatprep.subr.mxu0 0.0
    %654 = vmatpush1.msra.mxu0 0.0
    %655 = vmatprep.subr.mxu0 0.0
    %656 = vmatpush1.msra.mxu0 0.0
    %657 = vmatprep.subr.mxu0 0.0
    %658 = vmatpush1.msra.mxu0 0.0
    %659 = vmatprep.subr.mxu0 0.0
    %660 = vmatpush1.msra.mxu0 0.0
    %661 = vmatprep.subr.mxu0 0.0
    %662 = vmatpush1.msra.mxu0 0.0
    %663 = vmatprep.subr.mxu0 0.0
    %664 = vmatpush1.msra.mxu0 0.0
    %665 = vmatprep.subr.mxu0 0.0
    %666 = vmatpush1.msra.mxu0 0.0
    %667 = vmatprep.subr.mxu0 0.0
    %668 = vmatpush1.msra.mxu0 0.0
    %669 = vmatprep.mubr.f32.mxu0 0.0
    %670 = vmatmul.mubr.f32.gmra.mrb[0].mxu0 %v603
    %v671 = vpop.f32.mrb[0].mxu0
    %v672 = vadd.f32 0.0, %v671
    %v673 = vpop.f32.mrb[0].mxu0
    %674 = vdwg.mxu0
    %v675 = vadd.f32 %v356, %v672
    %v676 = vxor.u32 %v675, 2147483648
    %v677 = vmul.f32 %v676, 1.442695
    %v678 = vpow.pop %v677
    %v679 = vadd.f32 %v678, 1.0
    %v680 = vrcp.pop %v679
    %v681 = vmul.f32 1.0, %v680
    %v682 = vtanh.pop %v675
    %v683 = vmul.f32 %v681, %v586
    %685 = vrot.lane.b32.xlu0 %v682, 64
    %v686 = vpop.permute.xlu0 %685
    %v688 = vmul.f32 %v681, %v686
    %690 = vrot.lane.b32.xlu0 %v688, 32
    %v691 = vpop.permute.xlu0 %690
    %v693 = vadd.f32 %v683, %v691
    %v694 = vtanh.pop %v693
    %696 = vrot.lane.b32.xlu0 %v694, 64
    %v697 = vpop.permute.xlu0 %696
    %v699 = vmul.f32 %v681, %v697
    %v702 = vunpack.c.l.s4 1983009808
    %v703 = vunpack.c.0.s8 %v702
    %v704 = vlaneseq
    %v705 = vshrl.u32 %v704, 7
    %v706 = vsub.s32 %v703, %v705
    %v707 = vrot.slane %v699, %v706
    %708 = vrot.lane.b32.xlu0 %v707, 32
    %v709 = vpop.permute.xlu0 %708
    %v710 = vsel %vm258, %v709, 0
    %712 = vmatprep.subr.mxu0 0.0
    %713 = vmatpush1.msra.mxu0 %v384
    %714 = vmatprep.subr.mxu0 0.0
    %715 = vmatpush1.msra.mxu0 %v385
    %716 = vmatprep.subr.mxu0 0.0
    %717 = vmatpush1.msra.mxu0 %v386
    %718 = vmatprep.subr.mxu0 0.0
    %719 = vmatpush1.msra.mxu0 %v387
    %720 = vmatprep.subr.mxu0 0.0
    %721 = vmatpush1.msra.mxu0 0.0
    %722 = vmatprep.subr.mxu0 0.0
    %723 = vmatpush1.msra.mxu0 0.0
    %724 = vmatprep.subr.mxu0 0.0
    %725 = vmatpush1.msra.mxu0 0.0
    %726 = vmatprep.subr.mxu0 0.0
    %727 = vmatpush1.msra.mxu0 0.0
    %728 = vmatprep.subr.mxu0 0.0
    %729 = vmatpush1.msra.mxu0 0.0
    %730 = vmatprep.subr.mxu0 0.0
    %731 = vmatpush1.msra.mxu0 0.0
    %732 = vmatprep.subr.mxu0 0.0
    %733 = vmatpush1.msra.mxu0 0.0
    %734 = vmatprep.subr.mxu0 0.0
    %735 = vmatpush1.msra.mxu0 0.0
    %736 = vmatprep.subr.mxu0 0.0
    %737 = vmatpush1.msra.mxu0 0.0
    %738 = vmatprep.subr.mxu0 0.0
    %739 = vmatpush1.msra.mxu0 0.0
    %740 = vmatprep.subr.mxu0 0.0
    %741 = vmatpush1.msra.mxu0 0.0
    %742 = vmatprep.subr.mxu0 0.0
    %743 = vmatpush1.msra.mxu0 0.0
    %744 = vmatprep.subr.mxu0 0.0
    %745 = vmatpush1.msra.mxu0 0.0
    %746 = vmatprep.subr.mxu0 0.0
    %747 = vmatpush1.msra.mxu0 0.0
    %748 = vmatprep.subr.mxu0 0.0
    %749 = vmatpush1.msra.mxu0 0.0
    %750 = vmatprep.subr.mxu0 0.0
    %751 = vmatpush1.msra.mxu0 0.0
    %752 = vmatprep.subr.mxu0 0.0
    %753 = vmatpush1.msra.mxu0 0.0
    %754 = vmatprep.subr.mxu0 0.0
    %755 = vmatpush1.msra.mxu0 0.0
    %756 = vmatprep.subr.mxu0 0.0
    %757 = vmatpush1.msra.mxu0 0.0
    %758 = vmatprep.subr.mxu0 0.0
    %759 = vmatpush1.msra.mxu0 0.0
    %760 = vmatprep.subr.mxu0 0.0
    %761 = vmatpush1.msra.mxu0 0.0
    %762 = vmatprep.subr.mxu0 0.0
    %763 = vmatpush1.msra.mxu0 0.0
    %764 = vmatprep.subr.mxu0 0.0
    %765 = vmatpush1.msra.mxu0 0.0
    %766 = vmatprep.subr.mxu0 0.0
    %767 = vmatpush1.msra.mxu0 0.0
    %768 = vmatprep.subr.mxu0 0.0
    %769 = vmatpush1.msra.mxu0 0.0
    %770 = vmatprep.subr.mxu0 0.0
    %771 = vmatpush1.msra.mxu0 0.0
    %772 = vmatprep.subr.mxu0 0.0
    %773 = vmatpush1.msra.mxu0 0.0
    %774 = vmatprep.subr.mxu0 0.0
    %775 = vmatpush1.msra.mxu0 0.0
    %776 = vmatprep.mubr.f32.mxu0 0.0
    %777 = vmatmul.mubr.f32.gmra.mrb[0].mxu0 %v710
    %v778 = vpop.f32.mrb[0].mxu0
    %v779 = vadd.f32 0.0, %v778
    %v780 = vpop.f32.mrb[0].mxu0
    %781 = vdwg.mxu0
    %v782 = vadd.f32 %v358, %v779
    %v783 = vxor.u32 %v782, 2147483648
    %v784 = vmul.f32 %v783, 1.442695
    %v785 = vpow.pop %v784
    %v786 = vadd.f32 %v785, 1.0
    %v787 = vrcp.pop %v786
    %v788 = vmul.f32 1.0, %v787
    %v789 = vtanh.pop %v782
    %v790 = vmul.f32 %v788, %v693
    %792 = vrot.lane.b32.xlu0 %v789, 64
    %v793 = vpop.permute.xlu0 %792
    %v795 = vmul.f32 %v788, %v793
    %797 = vrot.lane.b32.xlu0 %v795, 32
    %v798 = vpop.permute.xlu0 %797
    %v800 = vadd.f32 %v790, %v798
    %v801 = vtanh.pop %v800
    %803 = vrot.lane.b32.xlu0 %v801, 64
    %v804 = vpop.permute.xlu0 %803
    %v806 = vmul.f32 %v788, %v804
    %v809 = vunpack.c.l.s4 1983009808
    %v810 = vunpack.c.0.s8 %v809
    %v811 = vlaneseq
    %v812 = vshrl.u32 %v811, 7
    %v813 = vsub.s32 %v810, %v812
    %v814 = vrot.slane %v806, %v813
    %815 = vrot.lane.b32.xlu0 %v814, 32
    %v816 = vpop.permute.xlu0 %815
    %v817 = vsel %vm258, %v816, 0
    %819 = vmatprep.subr.mxu0 0.0
    %820 = vmatpush1.msra.mxu0 %v384
    %821 = vmatprep.subr.mxu0 0.0
    %822 = vmatpush1.msra.mxu0 %v385
    %823 = vmatprep.subr.mxu0 0.0
    %824 = vmatpush1.msra.mxu0 %v386
    %825 = vmatprep.subr.mxu0 0.0
    %826 = vmatpush1.msra.mxu0 %v387
    %827 = vmatprep.subr.mxu0 0.0
    %828 = vmatpush1.msra.mxu0 0.0
    %829 = vmatprep.subr.mxu0 0.0
    %830 = vmatpush1.msra.mxu0 0.0
    %831 = vmatprep.subr.mxu0 0.0
    %832 = vmatpush1.msra.mxu0 0.0
    %833 = vmatprep.subr.mxu0 0.0
    %834 = vmatpush1.msra.mxu0 0.0
    %835 = vmatprep.subr.mxu0 0.0
    %836 = vmatpush1.msra.mxu0 0.0
    %837 = vmatprep.subr.mxu0 0.0
    %838 = vmatpush1.msra.mxu0 0.0
    %839 = vmatprep.subr.mxu0 0.0
    %840 = vmatpush1.msra.mxu0 0.0
    %841 = vmatprep.subr.mxu0 0.0
    %842 = vmatpush1.msra.mxu0 0.0
    %843 = vmatprep.subr.mxu0 0.0
    %844 = vmatpush1.msra.mxu0 0.0
    %845 = vmatprep.subr.mxu0 0.0
    %846 = vmatpush1.msra.mxu0 0.0
    %847 = vmatprep.subr.mxu0 0.0
    %848 = vmatpush1.msra.mxu0 0.0
    %849 = vmatprep.subr.mxu0 0.0
    %850 = vmatpush1.msra.mxu0 0.0
    %851 = vmatprep.subr.mxu0 0.0
    %852 = vmatpush1.msra.mxu0 0.0
    %853 = vmatprep.subr.mxu0 0.0
    %854 = vmatpush1.msra.mxu0 0.0
    %855 = vmatprep.subr.mxu0 0.0
    %856 = vmatpush1.msra.mxu0 0.0
    %857 = vmatprep.subr.mxu0 0.0
    %858 = vmatpush1.msra.mxu0 0.0
    %859 = vmatprep.subr.mxu0 0.0
    %860 = vmatpush1.msra.mxu0 0.0
    %861 = vmatprep.subr.mxu0 0.0
    %862 = vmatpush1.msra.mxu0 0.0
    %863 = vmatprep.subr.mxu0 0.0
    %864 = vmatpush1.msra.mxu0 0.0
    %865 = vmatprep.subr.mxu0 0.0
    %866 = vmatpush1.msra.mxu0 0.0
    %867 = vmatprep.subr.mxu0 0.0
    %868 = vmatpush1.msra.mxu0 0.0
    %869 = vmatprep.subr.mxu0 0.0
    %870 = vmatpush1.msra.mxu0 0.0
    %871 = vmatprep.subr.mxu0 0.0
    %872 = vmatpush1.msra.mxu0 0.0
    %873 = vmatprep.subr.mxu0 0.0
    %874 = vmatpush1.msra.mxu0 0.0
    %875 = vmatprep.subr.mxu0 0.0
    %876 = vmatpush1.msra.mxu0 0.0
    %877 = vmatprep.subr.mxu0 0.0
    %878 = vmatpush1.msra.mxu0 0.0
    %879 = vmatprep.subr.mxu0 0.0
    %880 = vmatpush1.msra.mxu0 0.0
    %881 = vmatprep.subr.mxu0 0.0
    %882 = vmatpush1.msra.mxu0 0.0
    %883 = vmatprep.mubr.f32.mxu0 0.0
    %884 = vmatmul.mubr.f32.gmra.mrb[0].mxu0 %v817
    %v885 = vpop.f32.mrb[0].mxu0
    %v886 = vadd.f32 0.0, %v885
    %v887 = vpop.f32.mrb[0].mxu0
    %888 = vdwg.mxu0
    %v889 = vadd.f32 %v366, %v886
    %v890 = vxor.u32 %v889, 2147483648
    %v891 = vmul.f32 %v890, 1.442695
    %v892 = vpow.pop %v891
    %v893 = vadd.f32 %v892, 1.0
    %v894 = vrcp.pop %v893
    %v895 = vmul.f32 1.0, %v894
    %v896 = vtanh.pop %v889
    %v897 = vmul.f32 %v895, %v800
    %899 = vrot.lane.b32.xlu0 %v896, 64
    %v900 = vpop.permute.xlu0 %899
    %v902 = vmul.f32 %v895, %v900
    %904 = vrot.lane.b32.xlu0 %v902, 32
    %v905 = vpop.permute.xlu0 %904
    %v907 = vadd.f32 %v897, %v905
    %v908 = vtanh.pop %v907
    %910 = vrot.lane.b32.xlu0 %v908, 64
    %v911 = vpop.permute.xlu0 %910
    %v913 = vmul.f32 %v895, %v911
    %v916 = vunpack.c.l.s4 1983009808
    %v917 = vunpack.c.0.s8 %v916
    %v918 = vlaneseq
    %v919 = vshrl.u32 %v918, 7
    %v920 = vsub.s32 %v917, %v919
    %v921 = vrot.slane %v913, %v920
    %922 = vrot.lane.b32.xlu0 %v921, 32
    %v923 = vpop.permute.xlu0 %922
    %v924 = vsel %vm258, %v923, 0
    %926 = vmatprep.subr.mxu0 0.0
    %927 = vmatpush1.msra.mxu0 %v384
    %928 = vmatprep.subr.mxu0 0.0
    %929 = vmatpush1.msra.mxu0 %v385
    %930 = vmatprep.subr.mxu0 0.0
    %931 = vmatpush1.msra.mxu0 %v386
    %932 = vmatprep.subr.mxu0 0.0
    %933 = vmatpush1.msra.mxu0 %v387
    %934 = vmatprep.subr.mxu0 0.0
    %935 = vmatpush1.msra.mxu0 0.0
    %936 = vmatprep.subr.mxu0 0.0
    %937 = vmatpush1.msra.mxu0 0.0
    %938 = vmatprep.subr.mxu0 0.0
    %939 = vmatpush1.msra.mxu0 0.0
    %940 = vmatprep.subr.mxu0 0.0
    %941 = vmatpush1.msra.mxu0 0.0
    %942 = vmatprep.subr.mxu0 0.0
    %943 = vmatpush1.msra.mxu0 0.0
    %944 = vmatprep.subr.mxu0 0.0
    %945 = vmatpush1.msra.mxu0 0.0
    %946 = vmatprep.subr.mxu0 0.0
    %947 = vmatpush1.msra.mxu0 0.0
    %948 = vmatprep.subr.mxu0 0.0
    %949 = vmatpush1.msra.mxu0 0.0
    %950 = vmatprep.subr.mxu0 0.0
    %951 = vmatpush1.msra.mxu0 0.0
    %952 = vmatprep.subr.mxu0 0.0
    %953 = vmatpush1.msra.mxu0 0.0
    %954 = vmatprep.subr.mxu0 0.0
    %955 = vmatpush1.msra.mxu0 0.0
    %956 = vmatprep.subr.mxu0 0.0
    %957 = vmatpush1.msra.mxu0 0.0
    %958 = vmatprep.subr.mxu0 0.0
    %959 = vmatpush1.msra.mxu0 0.0
    %960 = vmatprep.subr.mxu0 0.0
    %961 = vmatpush1.msra.mxu0 0.0
    %962 = vmatprep.subr.mxu0 0.0
    %963 = vmatpush1.msra.mxu0 0.0
    %964 = vmatprep.subr.mxu0 0.0
    %965 = vmatpush1.msra.mxu0 0.0
    %966 = vmatprep.subr.mxu0 0.0
    %967 = vmatpush1.msra.mxu0 0.0
    %968 = vmatprep.subr.mxu0 0.0
    %969 = vmatpush1.msra.mxu0 0.0
    %970 = vmatprep.subr.mxu0 0.0
    %971 = vmatpush1.msra.mxu0 0.0
    %972 = vmatprep.subr.mxu0 0.0
    %973 = vmatpush1.msra.mxu0 0.0
    %974 = vmatprep.subr.mxu0 0.0
    %975 = vmatpush1.msra.mxu0 0.0
    %976 = vmatprep.subr.mxu0 0.0
    %977 = vmatpush1.msra.mxu0 0.0
    %978 = vmatprep.subr.mxu0 0.0
    %979 = vmatpush1.msra.mxu0 0.0
    %980 = vmatprep.subr.mxu0 0.0
    %981 = vmatpush1.msra.mxu0 0.0
    %982 = vmatprep.subr.mxu0 0.0
    %983 = vmatpush1.msra.mxu0 0.0
    %984 = vmatprep.subr.mxu0 0.0
    %985 = vmatpush1.msra.mxu0 0.0
    %986 = vmatprep.subr.mxu0 0.0
    %987 = vmatpush1.msra.mxu0 0.0
    %988 = vmatprep.subr.mxu0 0.0
    %989 = vmatpush1.msra.mxu0 0.0
    %990 = vmatprep.mubr.f32.mxu0 0.0
    %991 = vmatmul.mubr.f32.gmra.mrb[0].mxu0 %v924
    %v992 = vpop.f32.mrb[0].mxu0
    %v993 = vadd.f32 0.0, %v992
    %v994 = vpop.f32.mrb[0].mxu0
    %995 = vdwg.mxu0
    %v996 = vadd.f32 %v374, %v993
    %v997 = vxor.u32 %v996, 2147483648
    %v998 = vmul.f32 %v997, 1.442695
    %v999 = vpow.pop %v998
    %v1000 = vadd.f32 %v999, 1.0
    %v1001 = vrcp.pop %v1000
    %v1002 = vmul.f32 1.0, %v1001
    %v1003 = vtanh.pop %v996
    %v1004 = vmul.f32 %v1002, %v907
    %1006 = vrot.lane.b32.xlu0 %v1003, 64
    %v1007 = vpop.permute.xlu0 %1006
    %v1009 = vmul.f32 %v1002, %v1007
    %1011 = vrot.lane.b32.xlu0 %v1009, 32
    %v1012 = vpop.permute.xlu0 %1011
    %v1014 = vadd.f32 %v1004, %v1012
    %v1015 = vtanh.pop %v1014
    %1017 = vrot.lane.b32.xlu0 %v1015, 64
    %v1018 = vpop.permute.xlu0 %1017
    %v1020 = vmul.f32 %v1002, %v1018
    %v1023 = vunpack.c.l.s4 1983009808
    %v1024 = vunpack.c.0.s8 %v1023
    %v1025 = vlaneseq
    %v1026 = vshrl.u32 %v1025, 7
    %v1027 = vsub.s32 %v1024, %v1026
    %v1028 = vrot.slane %v1020, %v1027
    %1029 = vrot.lane.b32.xlu0 %v1028, 32
    %v1030 = vpop.permute.xlu0 %1029
    %v1031 = vsel %vm258, %v1030, 0
    %1033 = vmatprep.subr.mxu0 0.0
    %1034 = vmatpush1.msra.mxu0 %v384
    %1035 = vmatprep.subr.mxu0 0.0
    %1036 = vmatpush1.msra.mxu0 %v385
    %1037 = vmatprep.subr.mxu0 0.0
    %1038 = vmatpush1.msra.mxu0 %v386
    %1039 = vmatprep.subr.mxu0 0.0
    %1040 = vmatpush1.msra.mxu0 %v387
    %1041 = vmatprep.subr.mxu0 0.0
    %1042 = vmatpush1.msra.mxu0 0.0
    %1043 = vmatprep.subr.mxu0 0.0
    %1044 = vmatpush1.msra.mxu0 0.0
    %1045 = vmatprep.subr.mxu0 0.0
    %1046 = vmatpush1.msra.mxu0 0.0
    %1047 = vmatprep.subr.mxu0 0.0
    %1048 = vmatpush1.msra.mxu0 0.0
    %1049 = vmatprep.subr.mxu0 0.0
    %1050 = vmatpush1.msra.mxu0 0.0
    %1051 = vmatprep.subr.mxu0 0.0
    %1052 = vmatpush1.msra.mxu0 0.0
    %1053 = vmatprep.subr.mxu0 0.0
    %1054 = vmatpush1.msra.mxu0 0.0
    %1055 = vmatprep.subr.mxu0 0.0
    %1056 = vmatpush1.msra.mxu0 0.0
    %1057 = vmatprep.subr.mxu0 0.0
    %1058 = vmatpush1.msra.mxu0 0.0
    %1059 = vmatprep.subr.mxu0 0.0
    %1060 = vmatpush1.msra.mxu0 0.0
    %1061 = vmatprep.subr.mxu0 0.0
    %1062 = vmatpush1.msra.mxu0 0.0
    %1063 = vmatprep.subr.mxu0 0.0
    %1064 = vmatpush1.msra.mxu0 0.0
    %1065 = vmatprep.subr.mxu0 0.0
    %1066 = vmatpush1.msra.mxu0 0.0
    %1067 = vmatprep.subr.mxu0 0.0
    %1068 = vmatpush1.msra.mxu0 0.0
    %1069 = vmatprep.subr.mxu0 0.0
    %1070 = vmatpush1.msra.mxu0 0.0
    %1071 = vmatprep.subr.mxu0 0.0
    %1072 = vmatpush1.msra.mxu0 0.0
    %1073 = vmatprep.subr.mxu0 0.0
    %1074 = vmatpush1.msra.mxu0 0.0
    %1075 = vmatprep.subr.mxu0 0.0
    %1076 = vmatpush1.msra.mxu0 0.0
    %1077 = vmatprep.subr.mxu0 0.0
    %1078 = vmatpush1.msra.mxu0 0.0
    %1079 = vmatprep.subr.mxu0 0.0
    %1080 = vmatpush1.msra.mxu0 0.0
    %1081 = vmatprep.subr.mxu0 0.0
    %1082 = vmatpush1.msra.mxu0 0.0
    %1083 = vmatprep.subr.mxu0 0.0
    %1084 = vmatpush1.msra.mxu0 0.0
    %1085 = vmatprep.subr.mxu0 0.0
    %1086 = vmatpush1.msra.mxu0 0.0
    %1087 = vmatprep.subr.mxu0 0.0
    %1088 = vmatpush1.msra.mxu0 0.0
    %1089 = vmatprep.subr.mxu0 0.0
    %1090 = vmatpush1.msra.mxu0 0.0
    %1091 = vmatprep.subr.mxu0 0.0
    %1092 = vmatpush1.msra.mxu0 0.0
    %1093 = vmatprep.subr.mxu0 0.0
    %1094 = vmatpush1.msra.mxu0 0.0
    %1095 = vmatprep.subr.mxu0 0.0
    %1096 = vmatpush1.msra.mxu0 0.0
    %1097 = vmatprep.mubr.f32.mxu0 0.0
    %1098 = vmatmul.mubr.f32.gmra.mrb[0].mxu0 %v1031
    %v1099 = vpop.f32.mrb[0].mxu0
    %v1100 = vadd.f32 0.0, %v1099
    %v1101 = vpop.f32.mrb[0].mxu0
    %1102 = vdwg.mxu0
    %v1103 = vadd.f32 %v373, %v1100
    %v1104 = vxor.u32 %v1103, 2147483648
    %v1105 = vmul.f32 %v1104, 1.442695
    %v1106 = vpow.pop %v1105
    %v1107 = vadd.f32 %v1106, 1.0
    %v1108 = vrcp.pop %v1107
    %v1109 = vmul.f32 1.0, %v1108
    %v1110 = vtanh.pop %v1103
    %v1111 = vmul.f32 %v1109, %v1014
    %1113 = vrot.lane.b32.xlu0 %v1110, 64
    %v1114 = vpop.permute.xlu0 %1113
    %v1116 = vmul.f32 %v1109, %v1114
    %1118 = vrot.lane.b32.xlu0 %v1116, 32
    %v1119 = vpop.permute.xlu0 %1118
    %v1121 = vadd.f32 %v1111, %v1119
    %v1122 = vtanh.pop %v1121
    %1124 = vrot.lane.b32.xlu0 %v1122, 64
    %v1125 = vpop.permute.xlu0 %1124
    %v1127 = vmul.f32 %v1109, %v1125
    %v1130 = vunpack.c.l.s4 1983009808
    %v1131 = vunpack.c.0.s8 %v1130
    %v1132 = vlaneseq
    %v1133 = vshrl.u32 %v1132, 7
    %v1134 = vsub.s32 %v1131, %v1133
    %v1135 = vrot.slane %v1127, %v1134
    %1136 = vrot.lane.b32.xlu0 %v1135, 32
    %v1137 = vpop.permute.xlu0 %1136
    %v1138 = vsel %vm258, %v1137, 0
    %1140 = vmatprep.subr.mxu0 0.0
    %1141 = vmatpush1.msra.mxu0 %v384
    %1142 = vmatprep.subr.mxu0 0.0
    %1143 = vmatpush1.msra.mxu0 %v385
    %1144 = vmatprep.subr.mxu0 0.0
    %1145 = vmatpush1.msra.mxu0 %v386
    %1146 = vmatprep.subr.mxu0 0.0
    %1147 = vmatpush1.msra.mxu0 %v387
    %1148 = vmatprep.subr.mxu0 0.0
    %1149 = vmatpush1.msra.mxu0 0.0
    %1150 = vmatprep.subr.mxu0 0.0
    %1151 = vmatpush1.msra.mxu0 0.0
    %1152 = vmatprep.subr.mxu0 0.0
    %1153 = vmatpush1.msra.mxu0 0.0
    %1154 = vmatprep.subr.mxu0 0.0
    %1155 = vmatpush1.msra.mxu0 0.0
    %1156 = vmatprep.subr.mxu0 0.0
    %1157 = vmatpush1.msra.mxu0 0.0
    %1158 = vmatprep.subr.mxu0 0.0
    %1159 = vmatpush1.msra.mxu0 0.0
    %1160 = vmatprep.subr.mxu0 0.0
    %1161 = vmatpush1.msra.mxu0 0.0
    %1162 = vmatprep.subr.mxu0 0.0
    %1163 = vmatpush1.msra.mxu0 0.0
    %1164 = vmatprep.subr.mxu0 0.0
    %1165 = vmatpush1.msra.mxu0 0.0
    %1166 = vmatprep.subr.mxu0 0.0
    %1167 = vmatpush1.msra.mxu0 0.0
    %1168 = vmatprep.subr.mxu0 0.0
    %1169 = vmatpush1.msra.mxu0 0.0
    %1170 = vmatprep.subr.mxu0 0.0
    %1171 = vmatpush1.msra.mxu0 0.0
    %1172 = vmatprep.subr.mxu0 0.0
    %1173 = vmatpush1.msra.mxu0 0.0
    %1174 = vmatprep.subr.mxu0 0.0
    %1175 = vmatpush1.msra.mxu0 0.0
    %1176 = vmatprep.subr.mxu0 0.0
    %1177 = vmatpush1.msra.mxu0 0.0
    %1178 = vmatprep.subr.mxu0 0.0
    %1179 = vmatpush1.msra.mxu0 0.0
    %1180 = vmatprep.subr.mxu0 0.0
    %1181 = vmatpush1.msra.mxu0 0.0
    %1182 = vmatprep.subr.mxu0 0.0
    %1183 = vmatpush1.msra.mxu0 0.0
    %1184 = vmatprep.subr.mxu0 0.0
    %1185 = vmatpush1.msra.mxu0 0.0
    %1186 = vmatprep.subr.mxu0 0.0
    %1187 = vmatpush1.msra.mxu0 0.0
    %1188 = vmatprep.subr.mxu0 0.0
    %1189 = vmatpush1.msra.mxu0 0.0
    %1190 = vmatprep.subr.mxu0 0.0
    %1191 = vmatpush1.msra.mxu0 0.0
    %1192 = vmatprep.subr.mxu0 0.0
    %1193 = vmatpush1.msra.mxu0 0.0
    %1194 = vmatprep.subr.mxu0 0.0
    %1195 = vmatpush1.msra.mxu0 0.0
    %1196 = vmatprep.subr.mxu0 0.0
    %1197 = vmatpush1.msra.mxu0 0.0
    %1198 = vmatprep.subr.mxu0 0.0
    %1199 = vmatpush1.msra.mxu0 0.0
    %1200 = vmatprep.subr.mxu0 0.0
    %1201 = vmatpush1.msra.mxu0 0.0
    %1202 = vmatprep.subr.mxu0 0.0
    %1203 = vmatpush1.msra.mxu0 0.0
    %1204 = vmatprep.mubr.f32.mxu0 0.0
    %1205 = vmatmul.mubr.f32.gmra.mrb[0].mxu0 %v1138
    %v1206 = vpop.f32.mrb[0].mxu0
    %v1207 = vadd.f32 0.0, %v1206
    %v1208 = vpop.f32.mrb[0].mxu0
    %1209 = vdwg.mxu0
    %v1210 = vadd.f32 %v375, %v1207
    %v1211 = vxor.u32 %v1210, 2147483648
    %v1212 = vmul.f32 %v1211, 1.442695
    %v1213 = vpow.pop %v1212
    %v1214 = vadd.f32 %v1213, 1.0
    %v1215 = vrcp.pop %v1214
    %v1216 = vmul.f32 1.0, %v1215
    %v1217 = vtanh.pop %v1210
    %v1218 = vmul.f32 %v1216, %v1121
    %1220 = vrot.lane.b32.xlu0 %v1217, 64
    %v1221 = vpop.permute.xlu0 %1220
    %v1223 = vmul.f32 %v1216, %v1221
    %1225 = vrot.lane.b32.xlu0 %v1223, 32
    %v1226 = vpop.permute.xlu0 %1225
    %v1228 = vadd.f32 %v1218, %v1226
    %v1229 = vtanh.pop %v1228
    %1231 = vrot.lane.b32.xlu0 %v1229, 64
    %v1232 = vpop.permute.xlu0 %1231
    %v1234 = vmul.f32 %v1216, %v1232
    %v1235 = vld [vmem:[#allocation7] sm:$0x3f]
    %v1236 = vld [vmem:[%s7] sm:$0xff]
    %v1237 = vld [vmem:[%s7 + $0x8] sm:$0xff]
    %v1238 = vld [vmem:[%s7 + $0x10] sm:$0xff]
    %v1239 = vld [vmem:[%s7 + $0x18] sm:$0xff]
    %v1242 = vunpack.c.l.s4 1983009808
    %v1243 = vunpack.c.0.s8 %v1242
    %v1244 = vlaneseq
    %v1245 = vshrl.u32 %v1244, 7
    %v1246 = vsub.s32 %v1243, %v1245
    %v1247 = vrot.slane %v1234, %v1246
    %1248 = vrot.lane.b32.xlu0 %v1247, 32
    %v1249 = vpop.permute.xlu0 %1248
    %v1250 = vsel %vm258, %v1249, 0
    %1252 = vmatprep.subr.mxu0 0.0
    %1253 = vmatpush1.msra.mxu0 %v1236
    %1254 = vmatprep.subr.mxu0 0.0
    %1255 = vmatpush1.msra.mxu0 %v1237
    %1256 = vmatprep.subr.mxu0 0.0
    %1257 = vmatpush1.msra.mxu0 %v1238
    %1258 = vmatprep.subr.mxu0 0.0
    %1259 = vmatpush1.msra.mxu0 %v1239
    %1260 = vmatprep.subr.mxu0 0.0
    %1261 = vmatpush1.msra.mxu0 0.0
    %1262 = vmatprep.subr.mxu0 0.0
    %1263 = vmatpush1.msra.mxu0 0.0
    %1264 = vmatprep.subr.mxu0 0.0
    %1265 = vmatpush1.msra.mxu0 0.0
    %1266 = vmatprep.subr.mxu0 0.0
    %1267 = vmatpush1.msra.mxu0 0.0
    %1268 = vmatprep.subr.mxu0 0.0
    %1269 = vmatpush1.msra.mxu0 0.0
    %1270 = vmatprep.subr.mxu0 0.0
    %1271 = vmatpush1.msra.mxu0 0.0
    %1272 = vmatprep.subr.mxu0 0.0
    %1273 = vmatpush1.msra.mxu0 0.0
    %1274 = vmatprep.subr.mxu0 0.0
    %1275 = vmatpush1.msra.mxu0 0.0
    %1276 = vmatprep.subr.mxu0 0.0
    %1277 = vmatpush1.msra.mxu0 0.0
    %1278 = vmatprep.subr.mxu0 0.0
    %1279 = vmatpush1.msra.mxu0 0.0
    %1280 = vmatprep.subr.mxu0 0.0
    %1281 = vmatpush1.msra.mxu0 0.0
    %1282 = vmatprep.subr.mxu0 0.0
    %1283 = vmatpush1.msra.mxu0 0.0
    %1284 = vmatprep.subr.mxu0 0.0
    %1285 = vmatpush1.msra.mxu0 0.0
    %1286 = vmatprep.subr.mxu0 0.0
    %1287 = vmatpush1.msra.mxu0 0.0
    %1288 = vmatprep.subr.mxu0 0.0
    %1289 = vmatpush1.msra.mxu0 0.0
    %1290 = vmatprep.subr.mxu0 0.0
    %1291 = vmatpush1.msra.mxu0 0.0
    %1292 = vmatprep.subr.mxu0 0.0
    %1293 = vmatpush1.msra.mxu0 0.0
    %1294 = vmatprep.subr.mxu0 0.0
    %1295 = vmatpush1.msra.mxu0 0.0
    %1296 = vmatprep.subr.mxu0 0.0
    %1297 = vmatpush1.msra.mxu0 0.0
    %1298 = vmatprep.subr.mxu0 0.0
    %1299 = vmatpush1.msra.mxu0 0.0
    %1300 = vmatprep.subr.mxu0 0.0
    %1301 = vmatpush1.msra.mxu0 0.0
    %1302 = vmatprep.subr.mxu0 0.0
    %1303 = vmatpush1.msra.mxu0 0.0
    %1304 = vmatprep.subr.mxu0 0.0
    %1305 = vmatpush1.msra.mxu0 0.0
    %1306 = vmatprep.subr.mxu0 0.0
    %1307 = vmatpush1.msra.mxu0 0.0
    %1308 = vmatprep.subr.mxu0 0.0
    %1309 = vmatpush1.msra.mxu0 0.0
    %1310 = vmatprep.subr.mxu0 0.0
    %1311 = vmatpush1.msra.mxu0 0.0
    %1312 = vmatprep.subr.mxu0 0.0
    %1313 = vmatpush1.msra.mxu0 0.0
    %1314 = vmatprep.subr.mxu0 0.0
    %1315 = vmatpush1.msra.mxu0 0.0
    %1316 = vmatprep.mubr.f32.mxu0 0.0
    %1317 = vmatmul.mubr.f32.gmra.mrb[0].mxu0 %v1250
    %v1318 = vpop.f32.mrb[0].mxu0
    %v1319 = vadd.f32 0.0, %v1318
    %v1320 = vpop.f32.mrb[0].mxu0
    %1321 = vdwg.mxu0
    %vm1322 = vcmask 48128
    %v1323 = vsel %vm1322, %v102, 0
    %vm1325 = vcmask 1045504
    %v1327 = vsel %vm1325, %v1235, 0
    %1329 = vmatprep.subr.mxu0 0.0
    %1330 = vmatpush1.msra.mxu0 %v1327
    %1331 = vmatprep.subr.mxu0 0.0
    %1332 = vmatpush1.msra.mxu0 0.0
    %1333 = vmatprep.subr.mxu0 0.0
    %1334 = vmatpush1.msra.mxu0 0.0
    %1335 = vmatprep.subr.mxu0 0.0
    %1336 = vmatpush1.msra.mxu0 0.0
    %1337 = vmatprep.subr.mxu0 0.0
    %1338 = vmatpush1.msra.mxu0 0.0
    %1339 = vmatprep.subr.mxu0 0.0
    %1340 = vmatpush1.msra.mxu0 0.0
    %1341 = vmatprep.subr.mxu0 0.0
    %1342 = vmatpush1.msra.mxu0 0.0
    %1343 = vmatprep.subr.mxu0 0.0
    %1344 = vmatpush1.msra.mxu0 0.0
    %1345 = vmatprep.subr.mxu0 0.0
    %1346 = vmatpush1.msra.mxu0 0.0
    %1347 = vmatprep.subr.mxu0 0.0
    %1348 = vmatpush1.msra.mxu0 0.0
    %1349 = vmatprep.subr.mxu0 0.0
    %1350 = vmatpush1.msra.mxu0 0.0
    %1351 = vmatprep.subr.mxu0 0.0
    %1352 = vmatpush1.msra.mxu0 0.0
    %1353 = vmatprep.subr.mxu0 0.0
    %1354 = vmatpush1.msra.mxu0 0.0
    %1355 = vmatprep.subr.mxu0 0.0
    %1356 = vmatpush1.msra.mxu0 0.0
    %1357 = vmatprep.subr.mxu0 0.0
    %1358 = vmatpush1.msra.mxu0 0.0
    %1359 = vmatprep.subr.mxu0 0.0
    %1360 = vmatpush1.msra.mxu0 0.0
    %1361 = vmatprep.subr.mxu0 0.0
    %1362 = vmatpush1.msra.mxu0 0.0
    %1363 = vmatprep.subr.mxu0 0.0
    %1364 = vmatpush1.msra.mxu0 0.0
    %1365 = vmatprep.subr.mxu0 0.0
    %1366 = vmatpush1.msra.mxu0 0.0
    %1367 = vmatprep.subr.mxu0 0.0
    %1368 = vmatpush1.msra.mxu0 0.0
    %1369 = vmatprep.subr.mxu0 0.0
    %1370 = vmatpush1.msra.mxu0 0.0
    %1371 = vmatprep.subr.mxu0 0.0
    %1372 = vmatpush1.msra.mxu0 0.0
    %1373 = vmatprep.subr.mxu0 0.0
    %1374 = vmatpush1.msra.mxu0 0.0
    %1375 = vmatprep.subr.mxu0 0.0
    %1376 = vmatpush1.msra.mxu0 0.0
    %1377 = vmatprep.subr.mxu0 0.0
    %1378 = vmatpush1.msra.mxu0 0.0
    %1379 = vmatprep.subr.mxu0 0.0
    %1380 = vmatpush1.msra.mxu0 0.0
    %1381 = vmatprep.subr.mxu0 0.0
    %1382 = vmatpush1.msra.mxu0 0.0
    %1383 = vmatprep.subr.mxu0 0.0
    %1384 = vmatpush1.msra.mxu0 0.0
    %1385 = vmatprep.subr.mxu0 0.0
    %1386 = vmatpush1.msra.mxu0 0.0
    %1387 = vmatprep.subr.mxu0 0.0
    %1388 = vmatpush1.msra.mxu0 0.0
    %1389 = vmatprep.subr.mxu0 0.0
    %1390 = vmatpush1.msra.mxu0 0.0
    %1391 = vmatprep.subr.mxu0 0.0
    %1392 = vmatpush1.msra.mxu0 0.0
    %1393 = vmatprep.mubr.f32.mxu0 0.0
    %1394 = vmatmul.mubr.f32.gmra.mrb[0].mxu0 %v1323
    %v1395 = vpop.f32.mrb[0].mxu0
    %v1396 = vadd.f32 %v1319, %v1395
    %v1397 = vpop.f32.mrb[0].mxu0
    %1398 = vdwg.mxu0
    %v1399 = vld [vmem:[#allocation9] sm:$0x1]
    %v1401 = vlaneseq
    %v1402 = vshrl.u32 %v1401, 7
    %v1403 = vsub.s32 0, %v1402
    %v1404 = vrot.slane %v1399, %v1403
    %v1406 = vadd.f32 %v1396, %v1404
    %v1407 = vmax.f32 %v1406, 0.0
    %v1408 = vld [vmem:[%s9] sm:$0xff]
    %v1409 = vld [vmem:[%s9 + $0x8] sm:$0xff]
    %v1410 = vld [vmem:[%s9 + $0x10] sm:$0xff]
    %v1411 = vld [vmem:[%s9 + $0x18] sm:$0xff]
    %v1412 = vld [vmem:[%s10] sm:$0x1]
    %v1414 = vlaneseq
    %v1415 = vshrl.u32 %v1414, 7
    %v1416 = vsub.s32 0, %v1415
    %v1417 = vrot.slane %v1412, %v1416
    %v1420 = vsel %vm258, %v1407, 0
    %1422 = vmatprep.subr.mxu0 0.0
    %1423 = vmatpush1.msra.mxu0 %v1408
    %1424 = vmatprep.subr.mxu0 0.0
    %1425 = vmatpush1.msra.mxu0 %v1409
    %1426 = vmatprep.subr.mxu0 0.0
    %1427 = vmatpush1.msra.mxu0 %v1410
    %1428 = vmatprep.subr.mxu0 0.0
    %1429 = vmatpush1.msra.mxu0 %v1411
    %1430 = vmatprep.subr.mxu0 0.0
    %1431 = vmatpush1.msra.mxu0 0.0
    %1432 = vmatprep.subr.mxu0 0.0
    %1433 = vmatpush1.msra.mxu0 0.0
    %1434 = vmatprep.subr.mxu0 0.0
    %1435 = vmatpush1.msra.mxu0 0.0
    %1436 = vmatprep.subr.mxu0 0.0
    %1437 = vmatpush1.msra.mxu0 0.0
    %1438 = vmatprep.subr.mxu0 0.0
    %1439 = vmatpush1.msra.mxu0 0.0
    %1440 = vmatprep.subr.mxu0 0.0
    %1441 = vmatpush1.msra.mxu0 0.0
    %1442 = vmatprep.subr.mxu0 0.0
    %1443 = vmatpush1.msra.mxu0 0.0
    %1444 = vmatprep.subr.mxu0 0.0
    %1445 = vmatpush1.msra.mxu0 0.0
    %1446 = vmatprep.subr.mxu0 0.0
    %1447 = vmatpush1.msra.mxu0 0.0
    %1448 = vmatprep.subr.mxu0 0.0
    %1449 = vmatpush1.msra.mxu0 0.0
    %1450 = vmatprep.subr.mxu0 0.0
    %1451 = vmatpush1.msra.mxu0 0.0
    %1452 = vmatprep.subr.mxu0 0.0
    %1453 = vmatpush1.msra.mxu0 0.0
    %1454 = vmatprep.subr.mxu0 0.0
    %1455 = vmatpush1.msra.mxu0 0.0
    %1456 = vmatprep.subr.mxu0 0.0
    %1457 = vmatpush1.msra.mxu0 0.0
    %1458 = vmatprep.subr.mxu0 0.0
    %1459 = vmatpush1.msra.mxu0 0.0
    %1460 = vmatprep.subr.mxu0 0.0
    %1461 = vmatpush1.msra.mxu0 0.0
    %1462 = vmatprep.subr.mxu0 0.0
    %1463 = vmatpush1.msra.mxu0 0.0
    %1464 = vmatprep.subr.mxu0 0.0
    %1465 = vmatpush1.msra.mxu0 0.0
    %1466 = vmatprep.subr.mxu0 0.0
    %1467 = vmatpush1.msra.mxu0 0.0
    %1468 = vmatprep.subr.mxu0 0.0
    %1469 = vmatpush1.msra.mxu0 0.0
    %1470 = vmatprep.subr.mxu0 0.0
    %1471 = vmatpush1.msra.mxu0 0.0
    %1472 = vmatprep.subr.mxu0 0.0
    %1473 = vmatpush1.msra.mxu0 0.0
    %1474 = vmatprep.subr.mxu0 0.0
    %1475 = vmatpush1.msra.mxu0 0.0
    %1476 = vmatprep.subr.mxu0 0.0
    %1477 = vmatpush1.msra.mxu0 0.0
    %1478 = vmatprep.subr.mxu0 0.0
    %1479 = vmatpush1.msra.mxu0 0.0
    %1480 = vmatprep.subr.mxu0 0.0
    %1481 = vmatpush1.msra.mxu0 0.0
    %1482 = vmatprep.subr.mxu0 0.0
    %1483 = vmatpush1.msra.mxu0 0.0
    %1484 = vmatprep.subr.mxu0 0.0
    %1485 = vmatpush1.msra.mxu0 0.0
    %1486 = vmatprep.mubr.f32.mxu0 0.0
    %1487 = vmatmul.mubr.f32.gmra.mrb[0].mxu0 %v1420
    %v1488 = vpop.f32.mrb[0].mxu0
    %v1489 = vadd.f32 %v1417, %v1488
    %v1490 = vpop.f32.mrb[0].mxu0
    %1491 = vdwg.mxu0
    %1492 = vxpose.xlu0.b32.start [1/16] %v1489, 128
    %1493 = vxpose.xlu0.b32.cont [2/16] 0.0, 128
    %1494 = vxpose.xlu0.b32.cont [3/16] 0.0, 128
    %1495 = vxpose.xlu0.b32.cont [4/16] 0.0, 128
    %1496 = vxpose.xlu0.b32.cont [5/16] 0.0, 128
    %1497 = vxpose.xlu0.b32.cont [6/16] 0.0, 128
    %1498 = vxpose.xlu0.b32.cont [7/16] 0.0, 128
    %1499 = vxpose.xlu0.b32.cont [8/16] 0.0, 128
    %1500 = vxpose.xlu0.b32.cont [9/16] 0.0, 128
    %1501 = vxpose.xlu0.b32.cont [10/16] 0.0, 128
    %1502 = vxpose.xlu0.b32.cont [11/16] 0.0, 128
    %1503 = vxpose.xlu0.b32.cont [12/16] 0.0, 128
    %1504 = vxpose.xlu0.b32.cont [13/16] 0.0, 128
    %1505 = vxpose.xlu0.b32.cont [14/16] 0.0, 128
    %1506 = vxpose.xlu0.b32.cont [15/16] 0.0, 128
    %1507 = vxpose.xlu0.b32.end [16/16] 0.0, 128
    %v1508 = vpop.trf.xlu0
    %v1509 = vpop.trf.xlu0
    %v1510 = vpop.trf.xlu0
    %v1511 = vpop.trf.xlu0
    %v1512 = vpop.trf.xlu0
    %v1513 = vpop.trf.xlu0
    %v1514 = vpop.trf.xlu0
    %v1515 = vpop.trf.xlu0
    %v1516 = vpop.trf.xlu0
    %v1517 = vpop.trf.xlu0
    %v1518 = vpop.trf.xlu0
    %v1519 = vpop.trf.xlu0
    %v1520 = vpop.trf.xlu0
    %v1521 = vpop.trf.xlu0
    %v1522 = vpop.trf.xlu0
    %v1523 = vpop.trf.xlu0
    %vm1524 = vcmask 15360
    %1525 = vst.msk [vmem:[%s11] sm:$0xff] %vm1524, %v1508
    // Predicated region
    $region66: #{tpu_custom_call.1} parent=1 // pred_check
      _
    $region67: #{tpu_custom_call.1} parent=1 // pred_check_branch
      %1527 = sbr.rel (0) target = $region69
    $region68: #{tpu_custom_call.1} parent=1 // pred_region
      _
    $region69: #{tpu_custom_call.1} parent=1 // pred_fallthru
      _
    // Predicated region
    $region70: #{tpu_custom_call.1} parent=1 // pred_check
      _
    $region71: #{tpu_custom_call.1} parent=1 // pred_check_branch
      %1529 = sbr.rel (0) target = $region73
    $region72: #{tpu_custom_call.1} parent=1 // pred_region
      _
    $region73: #{tpu_custom_call.1} parent=1 // pred_fallthru
      _
    %1530 = vsyncpa [#allocation3], 1
    %1531 = vsyncpa [#allocation5], 1
    %1532 = vsyncpa [#allocation8], 1

</llo_original>
